<compile_context>
chip_gen: v7x
topology: tpu7x:2x2x1
jax: 0.10.0
libtpu: 0.0.40
codegen_flags: <defaults>
</compile_context>

<pallas_src>
import functools

import jax
import jax.numpy as jnp
from jax.experimental import pallas as pl
from jax.experimental.pallas import tpu as pltpu


def _semseg_kernel(x_ref, w_ref, rep_ref, o_ref, *, K, C, S, W, CB):
    """One (batch, row-tile) grid step.

    x_ref:   (1, C, TR, W)      VMEM   NCHW row tile of the feature map
    w_ref:   (K, C)             SMEM   1x1 conv weight (scalar reads)
    rep_ref: (CB, CB*S)         VMEM   lane nearest-neighbour upsample matrix
    o_ref:   (1, K, TR, S*W*S)  VMEM   == final NCHW rows [h*S, (h+1)*S) per h
    """
    rep = rep_ref[...]
    WS = W * S
    for k in range(K):                       # classes are few (8..19): static unroll
        # ---- 1x1 conv: channel contraction on the VPU, rows stay on sublanes.
        yk = w_ref[k, 0] * x_ref[0, 0]       # (TR, W)
        for c in range(1, C):
            yk = yk + w_ref[k, c] * x_ref[0, c]
        # ---- nearest-neighbour upsample along W: exact 0/1 selection matmul
        #      per 128-column chunk (small live range), then S vertical row
        #      copies emitted as S contiguous lane-dense stores.
        for i in range(W // CB):
            zc = jnp.dot(yk[:, i * CB:(i + 1) * CB], rep,
                         preferred_element_type=jnp.float32)     # (TR, CB*S)
            zc = zc.astype(o_ref.dtype)
            base = i * CB * S
            for a in range(S):
                off = a * WS + base
                o_ref[0, k, :, off:off + CB * S] = zc


_DEFAULT_VMEM_CAP = 64 * 1024 * 1024      # conservative (v7x-sized) fallback


def _vmem_capacity_bytes():
    try:
        info = pltpu.get_tpu_info()
        cap = int(getattr(info, "vmem_capacity_bytes", 0) or 0)
        if cap > 0:
            return cap
    except Exception:
        pass
    return _DEFAULT_VMEM_CAP


def _pick_row_tile(N, H, W, C, K, S, itemsize, block_budget):
    """Largest row tile TR that divides H, respects the sublane rule on the
    second-to-last block dim, fits the per-step block budget, and leaves
    enough grid steps for pipelining / megacore sharding."""
    sub = max(8, 8 * (4 // max(itemsize, 1)))   # 8 rows f32, 16 bf16, 32 int8
    cands = [tr for tr in range(1, H + 1)
             if H % tr == 0 and (tr % sub == 0 or tr == H)]
    per_row = (K * S * S * W + C * W) * itemsize
    fitting = [tr for tr in cands if tr * per_row <= block_budget] or [min(cands)]
    busy = [tr for tr in fitting if N * (H // tr) >= 4]
    return max(busy) if busy else max(fitting)


def semseg_head_forward(x_nchw, weight, stride):
    """Pallas implementation of SemSegHead.forward (inference path).

    x_nchw: (N, C_in, H, W)   -- NCHW, as in the PyTorch module
    weight: (K, C_in, 1, 1)   -- nn.Conv2d(C_in, K, 1, bias=False).weight
    Returns (output_dict, losses_dict) like the PyTorch module.
    """
    N, C, H, W = x_nchw.shape
    K = weight.shape[0]
    S = int(stride)
    dtype = x_nchw.dtype
    itemsize = jnp.dtype(dtype).itemsize

    cap = _vmem_capacity_bytes()
    # Per-step block budget: ~3 MiB on 64 MiB parts (v7x), ~6 MiB on 128 MiB
    # parts (v5e/v6e).  Double buffering is accounted for in the vmem limit.
    block_budget = (3 if cap <= 64 * 1024 * 1024 else 6) * 1024 * 1024
    TR = _pick_row_tile(N, H, W, C, K, S, itemsize, block_budget)

    # Column-chunk size for the lane-upsample selection matmul (rep is
    # block-diagonal over chunks, so one (CB, CB*S) matrix serves all chunks).
    CB = 128 if W % 128 == 0 else W

    # 1x1 conv weight as (K, C) float32 scalars (read from SMEM in the kernel).
    w_kc = weight.reshape(K, C).astype(jnp.float32)

    # rep[w0, q] = 1 if q // S == w0 else 0   (exact 0/1 selection matrix).
    q = jnp.arange(CB * S, dtype=jnp.int32)
    rep = (jnp.arange(CB, dtype=jnp.int32)[:, None] == (q[None, :] // S)
           ).astype(jnp.float32)                                   # (CB, CB*S)

    # VMEM accounting: double-buffered x/out blocks + rep (+ slack).
    x_blk = C * TR * W * itemsize
    o_blk = K * TR * S * S * W * itemsize
    rep_blk = CB * CB * S * 4
    need = 2 * (x_blk + o_blk + rep_blk) + (1 << 20)
    vmem_limit = int(min(max(2 * need, 32 * 1024 * 1024), cap * 3 // 4))

    grid = (N, H // TR)
    kernel = functools.partial(_semseg_kernel, K=K, C=C, S=S, W=W, CB=CB)

    out = pl.pallas_call(
        kernel,
        out_shape=jax.ShapeDtypeStruct((N, K, H, S * W * S), dtype),
        grid_spec=pltpu.PrefetchScalarGridSpec(
            num_scalar_prefetch=0,
            grid=grid,
            in_specs=[
                pl.BlockSpec((1, C, TR, W), lambda n, r: (n, 0, r, 0)),
                pl.BlockSpec(memory_space=pltpu.MemorySpace.SMEM),
                pl.BlockSpec((CB, CB * S), lambda n, r: (0, 0)),
            ],
            out_specs=pl.BlockSpec((1, K, TR, S * W * S),
                                   lambda n, r: (n, 0, r, 0)),
        ),
        compiler_params=pltpu.CompilerParams(
            # Both grid axes are fully independent -> megacore-shardable (v7x).
            dimension_semantics=("parallel", "parallel"),
            vmem_limit_bytes=vmem_limit,
        ),
        cost_estimate=pl.CostEstimate(
            flops=2 * N * H * W * C * K + 2 * N * H * K * W * CB * S,
            transcendentals=0,
            bytes_accessed=(N * C * H * W + N * K * H * S * S * W) * itemsize
                           + (K * C + CB * CB * S) * 4,
        ),
    )(x_nchw, w_kc, rep)

    # Free, contiguous reshape: (N, K, H, S*W*S) and (N, K, H*S, W*S) share the
    # same row-major buffer — no data movement.
    semseg = out.reshape(N, K, H * S, W * S)

    output = {"semseg": semseg}
    losses = {}
    # TODO(synk): training branch cross_entropy(ignore_index=-1)*loss_weight not implemented.
    return output, losses


if __name__ == "__main__":
    key = jax.random.PRNGKey(0)
    kx, kw = jax.random.split(key)

    # Small shapes consistent with the module:
    N, C_IN, H, W = 2, 4, 16, 16         # batch, BACKBONE3D.CHANNELS[0], spatial
    NUM_CLASSES = 8                      # HEADS2D.SEMSEG.NUM_CLASSES
    STRIDE = 2                           # head stride

    x = jax.random.normal(kx, (N, C_IN, H, W), dtype=jnp.float32)
    weight = 0.1 * jax.random.normal(kw, (NUM_CLASSES, C_IN, 1, 1),
                                     dtype=jnp.float32)

    output, losses = semseg_head_forward(x, weight, STRIDE)
    semseg = jax.block_until_ready(output["semseg"])

    # Pure-JAX reference: 1x1 conv + nearest upsample.
    ref = jnp.einsum("nchw,kc->nkhw", x, weight.reshape(NUM_CLASSES, C_IN))
    ref = jnp.repeat(jnp.repeat(ref, STRIDE, axis=2), STRIDE, axis=3)

    assert semseg.shape == (N, NUM_CLASSES, H * STRIDE, W * STRIDE), semseg.shape
    assert jnp.allclose(semseg, ref, atol=1e-4, rtol=1e-4), float(
        jnp.max(jnp.abs(semseg - ref)))
    print("KERNEL_OK")
</pallas_src>

<mosaic_0001>
module attributes {stable_mosaic.version = 11 : i64} {
  func.func @_semseg_kernel(%arg0: i32, %arg1: i32, %arg2: memref<1x4x8x16xf32, #tpu.memory_space<vmem>>, %arg3: memref<8x4xf32, #tpu.memory_space<smem>>, %arg4: memref<16x32xf32, #tpu.memory_space<vmem>>, %arg5: memref<1x8x8x64xf32, #tpu.memory_space<vmem>>) attributes {dimension_semantics = [#tpu.dimension_semantics<parallel>, #tpu.dimension_semantics<parallel>], iteration_bounds = array<i64: 2, 2>, scalar_prefetch = 0 : i64, scratch_operands = 0 : i64, tpu.core_type = #tpu.core_type<tc>, window_params = [{transform_indices = @transform_0, window_bounds = array<i64: 1, 4, 8, 16>}, {transform_indices = @transform_1, window_bounds = array<i64: 8, 4>}, {pipeline_mode = #tpu.pipeline_mode<synchronous>, transform_indices = @transform_2, window_bounds = array<i64: 16, 32>}, {transform_indices = @transform_3, window_bounds = array<i64: 1, 8, 8, 64>}]} {
    %c0 = arith.constant 0 : index
    %c0_0 = arith.constant 0 : index
    %0 = vector.load %arg4[%c0, %c0_0] : memref<16x32xf32, #tpu.memory_space<vmem>>, vector<16x32xf32>
    %c0_1 = arith.constant 0 : index
    %c0_2 = arith.constant 0 : index
    %1 = memref.load %arg3[%c0_1, %c0_2] : memref<8x4xf32, #tpu.memory_space<smem>>
    %c0_3 = arith.constant 0 : index
    %c0_4 = arith.constant 0 : index
    %c0_5 = arith.constant 0 : index
    %c0_6 = arith.constant 0 : index
    %2 = vector.load %arg2[%c0_3, %c0_4, %c0_5, %c0_6] : memref<1x4x8x16xf32, #tpu.memory_space<vmem>>, vector<1x1x8x16xf32>
    %3 = vector.shape_cast %2 : vector<1x1x8x16xf32> to vector<8x16xf32>
    %4 = vector.broadcast %1 : f32 to vector<8x16xf32>
    %5 = arith.mulf %4, %3 : vector<8x16xf32>
    %c0_7 = arith.constant 0 : index
    %c1 = arith.constant 1 : index
    %6 = memref.load %arg3[%c0_7, %c1] : memref<8x4xf32, #tpu.memory_space<smem>>
    %c0_8 = arith.constant 0 : index
    %c1_9 = arith.constant 1 : index
    %c0_10 = arith.constant 0 : index
    %c0_11 = arith.constant 0 : index
    %7 = vector.load %arg2[%c0_8, %c1_9, %c0_10, %c0_11] : memref<1x4x8x16xf32, #tpu.memory_space<vmem>>, vector<1x1x8x16xf32>
    %8 = vector.shape_cast %7 : vector<1x1x8x16xf32> to vector<8x16xf32>
    %9 = vector.broadcast %6 : f32 to vector<8x16xf32>
    %10 = arith.mulf %9, %8 : vector<8x16xf32>
    %11 = arith.addf %5, %10 : vector<8x16xf32>
    %c0_12 = arith.constant 0 : index
    %c2 = arith.constant 2 : index
    %12 = memref.load %arg3[%c0_12, %c2] : memref<8x4xf32, #tpu.memory_space<smem>>
    %c0_13 = arith.constant 0 : index
    %c2_14 = arith.constant 2 : index
    %c0_15 = arith.constant 0 : index
    %c0_16 = arith.constant 0 : index
    %13 = vector.load %arg2[%c0_13, %c2_14, %c0_15, %c0_16] : memref<1x4x8x16xf32, #tpu.memory_space<vmem>>, vector<1x1x8x16xf32>
    %14 = vector.shape_cast %13 : vector<1x1x8x16xf32> to vector<8x16xf32>
    %15 = vector.broadcast %12 : f32 to vector<8x16xf32>
    %16 = arith.mulf %15, %14 : vector<8x16xf32>
    %17 = arith.addf %11, %16 : vector<8x16xf32>
    %c0_17 = arith.constant 0 : index
    %c3 = arith.constant 3 : index
    %18 = memref.load %arg3[%c0_17, %c3] : memref<8x4xf32, #tpu.memory_space<smem>>
    %c0_18 = arith.constant 0 : index
    %c3_19 = arith.constant 3 : index
    %c0_20 = arith.constant 0 : index
    %c0_21 = arith.constant 0 : index
    %19 = vector.load %arg2[%c0_18, %c3_19, %c0_20, %c0_21] : memref<1x4x8x16xf32, #tpu.memory_space<vmem>>, vector<1x1x8x16xf32>
    %20 = vector.shape_cast %19 : vector<1x1x8x16xf32> to vector<8x16xf32>
    %21 = vector.broadcast %18 : f32 to vector<8x16xf32>
    %22 = arith.mulf %21, %20 : vector<8x16xf32>
    %23 = arith.addf %17, %22 : vector<8x16xf32>
    %cst = arith.constant dense<0.000000e+00> : vector<8x32xf32>
    %24 = tpu.matmul %23, %0, %cst {dimension_numbers = #tpu.dot_dimension_numbers<[1], [0], [0], [1], [0, 0, 1, 1], [], []>} : vector<8x16xf32>, vector<16x32xf32>, vector<8x32xf32> -> vector<8x32xf32>
    %c0_22 = arith.constant 0 : index
    %c0_23 = arith.constant 0 : index
    %c0_24 = arith.constant 0 : index
    %c0_25 = arith.constant 0 : index
    %25 = vector.load %arg5[%c0_22, %c0_23, %c0_24, %c0_25] : memref<1x8x8x64xf32, #tpu.memory_space<vmem>>, vector<1x1x8x32xf32>
    %26 = vector.shape_cast %25 : vector<1x1x8x32xf32> to vector<8x32xf32>
    %27 = vector.shape_cast %24 : vector<8x32xf32> to vector<1x1x8x32xf32>
    tpu.vector_store %arg5[%c0_22, %c0_23, %c0_24, %c0_25], %27 {strides = array<i32>} : memref<1x8x8x64xf32, #tpu.memory_space<vmem>>, vector<1x1x8x32xf32>,
    %c0_26 = arith.constant 0 : index
    %c0_27 = arith.constant 0 : index
    %c0_28 = arith.constant 0 : index
    %c32 = arith.constant 32 : index
    %28 = vector.load %arg5[%c0_26, %c0_27, %c0_28, %c32] : memref<1x8x8x64xf32, #tpu.memory_space<vmem>>, vector<1x1x8x32xf32>
    %29 = vector.shape_cast %28 : vector<1x1x8x32xf32> to vector<8x32xf32>
    %30 = vector.shape_cast %24 : vector<8x32xf32> to vector<1x1x8x32xf32>
    tpu.vector_store %arg5[%c0_26, %c0_27, %c0_28, %c32], %30 {strides = array<i32>} : memref<1x8x8x64xf32, #tpu.memory_space<vmem>>, vector<1x1x8x32xf32>,
    %c1_29 = arith.constant 1 : index
    %c0_30 = arith.constant 0 : index
    %31 = memref.load %arg3[%c1_29, %c0_30] : memref<8x4xf32, #tpu.memory_space<smem>>
    %c0_31 = arith.constant 0 : index
    %c0_32 = arith.constant 0 : index
    %c0_33 = arith.constant 0 : index
    %c0_34 = arith.constant 0 : index
    %32 = vector.load %arg2[%c0_31, %c0_32, %c0_33, %c0_34] : memref<1x4x8x16xf32, #tpu.memory_space<vmem>>, vector<1x1x8x16xf32>
    %33 = vector.shape_cast %32 : vector<1x1x8x16xf32> to vector<8x16xf32>
    %34 = vector.broadcast %31 : f32 to vector<8x16xf32>
    %35 = arith.mulf %34, %33 : vector<8x16xf32>
    %c1_35 = arith.constant 1 : index
    %c1_36 = arith.constant 1 : index
    %36 = memref.load %arg3[%c1_35, %c1_36] : memref<8x4xf32, #tpu.memory_space<smem>>
    %c0_37 = arith.constant 0 : index
    %c1_38 = arith.constant 1 : index
    %c0_39 = arith.constant 0 : index
    %c0_40 = arith.constant 0 : index
    %37 = vector.load %arg2[%c0_37, %c1_38, %c0_39, %c0_40] : memref<1x4x8x16xf32, #tpu.memory_space<vmem>>, vector<1x1x8x16xf32>
    %38 = vector.shape_cast %37 : vector<1x1x8x16xf32> to vector<8x16xf32>
    %39 = vector.broadcast %36 : f32 to vector<8x16xf32>
    %40 = arith.mulf %39, %38 : vector<8x16xf32>
    %41 = arith.addf %35, %40 : vector<8x16xf32>
    %c1_41 = arith.constant 1 : index
    %c2_42 = arith.constant 2 : index
    %42 = memref.load %arg3[%c1_41, %c2_42] : memref<8x4xf32, #tpu.memory_space<smem>>
    %c0_43 = arith.constant 0 : index
    %c2_44 = arith.constant 2 : index
    %c0_45 = arith.constant 0 : index
    %c0_46 = arith.constant 0 : index
    %43 = vector.load %arg2[%c0_43, %c2_44, %c0_45, %c0_46] : memref<1x4x8x16xf32, #tpu.memory_space<vmem>>, vector<1x1x8x16xf32>
    %44 = vector.shape_cast %43 : vector<1x1x8x16xf32> to vector<8x16xf32>
    %45 = vector.broadcast %42 : f32 to vector<8x16xf32>
    %46 = arith.mulf %45, %44 : vector<8x16xf32>
    %47 = arith.addf %41, %46 : vector<8x16xf32>
    %c1_47 = arith.constant 1 : index
    %c3_48 = arith.constant 3 : index
    %48 = memref.load %arg3[%c1_47, %c3_48] : memref<8x4xf32, #tpu.memory_space<smem>>
    %c0_49 = arith.constant 0 : index
    %c3_50 = arith.constant 3 : index
    %c0_51 = arith.constant 0 : index
    %c0_52 = arith.constant 0 : index
    %49 = vector.load %arg2[%c0_49, %c3_50, %c0_51, %c0_52] : memref<1x4x8x16xf32, #tpu.memory_space<vmem>>, vector<1x1x8x16xf32>
    %50 = vector.shape_cast %49 : vector<1x1x8x16xf32> to vector<8x16xf32>
    %51 = vector.broadcast %48 : f32 to vector<8x16xf32>
    %52 = arith.mulf %51, %50 : vector<8x16xf32>
    %53 = arith.addf %47, %52 : vector<8x16xf32>
    %cst_53 = arith.constant dense<0.000000e+00> : vector<8x32xf32>
    %54 = tpu.matmul %53, %0, %cst_53 {dimension_numbers = #tpu.dot_dimension_numbers<[1], [0], [0], [1], [0, 0, 1, 1], [], []>} : vector<8x16xf32>, vector<16x32xf32>, vector<8x32xf32> -> vector<8x32xf32>
    %c0_54 = arith.constant 0 : index
    %c1_55 = arith.constant 1 : index
    %c0_56 = arith.constant 0 : index
    %c0_57 = arith.constant 0 : index
    %55 = vector.load %arg5[%c0_54, %c1_55, %c0_56, %c0_57] : memref<1x8x8x64xf32, #tpu.memory_space<vmem>>, vector<1x1x8x32xf32>
    %56 = vector.shape_cast %55 : vector<1x1x8x32xf32> to vector<8x32xf32>
    %57 = vector.shape_cast %54 : vector<8x32xf32> to vector<1x1x8x32xf32>
    tpu.vector_store %arg5[%c0_54, %c1_55, %c0_56, %c0_57], %57 {strides = array<i32>} : memref<1x8x8x64xf32, #tpu.memory_space<vmem>>, vector<1x1x8x32xf32>,
    %c0_58 = arith.constant 0 : index
    %c1_59 = arith.constant 1 : index
    %c0_60 = arith.constant 0 : index
    %c32_61 = arith.constant 32 : index
    %58 = vector.load %arg5[%c0_58, %c1_59, %c0_60, %c32_61] : memref<1x8x8x64xf32, #tpu.memory_space<vmem>>, vector<1x1x8x32xf32>
    %59 = vector.shape_cast %58 : vector<1x1x8x32xf32> to vector<8x32xf32>
    %60 = vector.shape_cast %54 : vector<8x32xf32> to vector<1x1x8x32xf32>
    tpu.vector_store %arg5[%c0_58, %c1_59, %c0_60, %c32_61], %60 {strides = array<i32>} : memref<1x8x8x64xf32, #tpu.memory_space<vmem>>, vector<1x1x8x32xf32>,
    %c2_62 = arith.constant 2 : index
    %c0_63 = arith.constant 0 : index
    %61 = memref.load %arg3[%c2_62, %c0_63] : memref<8x4xf32, #tpu.memory_space<smem>>
    %c0_64 = arith.constant 0 : index
    %c0_65 = arith.constant 0 : index
    %c0_66 = arith.constant 0 : index
    %c0_67 = arith.constant 0 : index
    %62 = vector.load %arg2[%c0_64, %c0_65, %c0_66, %c0_67] : memref<1x4x8x16xf32, #tpu.memory_space<vmem>>, vector<1x1x8x16xf32>
    %63 = vector.shape_cast %62 : vector<1x1x8x16xf32> to vector<8x16xf32>
    %64 = vector.broadcast %61 : f32 to vector<8x16xf32>
    %65 = arith.mulf %64, %63 : vector<8x16xf32>
    %c2_68 = arith.constant 2 : index
    %c1_69 = arith.constant 1 : index
    %66 = memref.load %arg3[%c2_68, %c1_69] : memref<8x4xf32, #tpu.memory_space<smem>>
    %c0_70 = arith.constant 0 : index
    %c1_71 = arith.constant 1 : index
    %c0_72 = arith.constant 0 : index
    %c0_73 = arith.constant 0 : index
    %67 = vector.load %arg2[%c0_70, %c1_71, %c0_72, %c0_73] : memref<1x4x8x16xf32, #tpu.memory_space<vmem>>, vector<1x1x8x16xf32>
    %68 = vector.shape_cast %67 : vector<1x1x8x16xf32> to vector<8x16xf32>
    %69 = vector.broadcast %66 : f32 to vector<8x16xf32>
    %70 = arith.mulf %69, %68 : vector<8x16xf32>
    %71 = arith.addf %65, %70 : vector<8x16xf32>
    %c2_74 = arith.constant 2 : index
    %c2_75 = arith.constant 2 : index
    %72 = memref.load %arg3[%c2_74, %c2_75] : memref<8x4xf32, #tpu.memory_space<smem>>
    %c0_76 = arith.constant 0 : index
    %c2_77 = arith.constant 2 : index
    %c0_78 = arith.constant 0 : index
    %c0_79 = arith.constant 0 : index
    %73 = vector.load %arg2[%c0_76, %c2_77, %c0_78, %c0_79] : memref<1x4x8x16xf32, #tpu.memory_space<vmem>>, vector<1x1x8x16xf32>
    %74 = vector.shape_cast %73 : vector<1x1x8x16xf32> to vector<8x16xf32>
    %75 = vector.broadcast %72 : f32 to vector<8x16xf32>
    %76 = arith.mulf %75, %74 : vector<8x16xf32>
    %77 = arith.addf %71, %76 : vector<8x16xf32>
    %c2_80 = arith.constant 2 : index
    %c3_81 = arith.constant 3 : index
    %78 = memref.load %arg3[%c2_80, %c3_81] : memref<8x4xf32, #tpu.memory_space<smem>>
    %c0_82 = arith.constant 0 : index
    %c3_83 = arith.constant 3 : index
    %c0_84 = arith.constant 0 : index
    %c0_85 = arith.constant 0 : index
    %79 = vector.load %arg2[%c0_82, %c3_83, %c0_84, %c0_85] : memref<1x4x8x16xf32, #tpu.memory_space<vmem>>, vector<1x1x8x16xf32>
    %80 = vector.shape_cast %79 : vector<1x1x8x16xf32> to vector<8x16xf32>
    %81 = vector.broadcast %78 : f32 to vector<8x16xf32>
    %82 = arith.mulf %81, %80 : vector<8x16xf32>
    %83 = arith.addf %77, %82 : vector<8x16xf32>
    %cst_86 = arith.constant dense<0.000000e+00> : vector<8x32xf32>
    %84 = tpu.matmul %83, %0, %cst_86 {dimension_numbers = #tpu.dot_dimension_numbers<[1], [0], [0], [1], [0, 0, 1, 1], [], []>} : vector<8x16xf32>, vector<16x32xf32>, vector<8x32xf32> -> vector<8x32xf32>
    %c0_87 = arith.constant 0 : index
    %c2_88 = arith.constant 2 : index
    %c0_89 = arith.constant 0 : index
    %c0_90 = arith.constant 0 : index
    %85 = vector.load %arg5[%c0_87, %c2_88, %c0_89, %c0_90] : memref<1x8x8x64xf32, #tpu.memory_space<vmem>>, vector<1x1x8x32xf32>
    %86 = vector.shape_cast %85 : vector<1x1x8x32xf32> to vector<8x32xf32>
    %87 = vector.shape_cast %84 : vector<8x32xf32> to vector<1x1x8x32xf32>
    tpu.vector_store %arg5[%c0_87, %c2_88, %c0_89, %c0_90], %87 {strides = array<i32>} : memref<1x8x8x64xf32, #tpu.memory_space<vmem>>, vector<1x1x8x32xf32>,
    %c0_91 = arith.constant 0 : index
    %c2_92 = arith.constant 2 : index
    %c0_93 = arith.constant 0 : index
    %c32_94 = arith.constant 32 : index
    %88 = vector.load %arg5[%c0_91, %c2_92, %c0_93, %c32_94] : memref<1x8x8x64xf32, #tpu.memory_space<vmem>>, vector<1x1x8x32xf32>
    %89 = vector.shape_cast %88 : vector<1x1x8x32xf32> to vector<8x32xf32>
    %90 = vector.shape_cast %84 : vector<8x32xf32> to vector<1x1x8x32xf32>
    tpu.vector_store %arg5[%c0_91, %c2_92, %c0_93, %c32_94], %90 {strides = array<i32>} : memref<1x8x8x64xf32, #tpu.memory_space<vmem>>, vector<1x1x8x32xf32>,
    %c3_95 = arith.constant 3 : index
    %c0_96 = arith.constant 0 : index
    %91 = memref.load %arg3[%c3_95, %c0_96] : memref<8x4xf32, #tpu.memory_space<smem>>
    %c0_97 = arith.constant 0 : index
    %c0_98 = arith.constant 0 : index
    %c0_99 = arith.constant 0 : index
    %c0_100 = arith.constant 0 : index
    %92 = vector.load %arg2[%c0_97, %c0_98, %c0_99, %c0_100] : memref<1x4x8x16xf32, #tpu.memory_space<vmem>>, vector<1x1x8x16xf32>
    %93 = vector.shape_cast %92 : vector<1x1x8x16xf32> to vector<8x16xf32>
    %94 = vector.broadcast %91 : f32 to vector<8x16xf32>
    %95 = arith.mulf %94, %93 : vector<8x16xf32>
    %c3_101 = arith.constant 3 : index
    %c1_102 = arith.constant 1 : index
    %96 = memref.load %arg3[%c3_101, %c1_102] : memref<8x4xf32, #tpu.memory_space<smem>>
    %c0_103 = arith.constant 0 : index
    %c1_104 = arith.constant 1 : index
    %c0_105 = arith.constant 0 : index
    %c0_106 = arith.constant 0 : index
    %97 = vector.load %arg2[%c0_103, %c1_104, %c0_105, %c0_106] : memref<1x4x8x16xf32, #tpu.memory_space<vmem>>, vector<1x1x8x16xf32>
    %98 = vector.shape_cast %97 : vector<1x1x8x16xf32> to vector<8x16xf32>
    %99 = vector.broadcast %96 : f32 to vector<8x16xf32>
    %100 = arith.mulf %99, %98 : vector<8x16xf32>
    %101 = arith.addf %95, %100 : vector<8x16xf32>
    %c3_107 = arith.constant 3 : index
    %c2_108 = arith.constant 2 : index
    %102 = memref.load %arg3[%c3_107, %c2_108] : memref<8x4xf32, #tpu.memory_space<smem>>
    %c0_109 = arith.constant 0 : index
    %c2_110 = arith.constant 2 : index
    %c0_111 = arith.constant 0 : index
    %c0_112 = arith.constant 0 : index
    %103 = vector.load %arg2[%c0_109, %c2_110, %c0_111, %c0_112] : memref<1x4x8x16xf32, #tpu.memory_space<vmem>>, vector<1x1x8x16xf32>
    %104 = vector.shape_cast %103 : vector<1x1x8x16xf32> to vector<8x16xf32>
    %105 = vector.broadcast %102 : f32 to vector<8x16xf32>
    %106 = arith.mulf %105, %104 : vector<8x16xf32>
    %107 = arith.addf %101, %106 : vector<8x16xf32>
    %c3_113 = arith.constant 3 : index
    %c3_114 = arith.constant 3 : index
    %108 = memref.load %arg3[%c3_113, %c3_114] : memref<8x4xf32, #tpu.memory_space<smem>>
    %c0_115 = arith.constant 0 : index
    %c3_116 = arith.constant 3 : index
    %c0_117 = arith.constant 0 : index
    %c0_118 = arith.constant 0 : index
    %109 = vector.load %arg2[%c0_115, %c3_116, %c0_117, %c0_118] : memref<1x4x8x16xf32, #tpu.memory_space<vmem>>, vector<1x1x8x16xf32>
    %110 = vector.shape_cast %109 : vector<1x1x8x16xf32> to vector<8x16xf32>
    %111 = vector.broadcast %108 : f32 to vector<8x16xf32>
    %112 = arith.mulf %111, %110 : vector<8x16xf32>
    %113 = arith.addf %107, %112 : vector<8x16xf32>
    %cst_119 = arith.constant dense<0.000000e+00> : vector<8x32xf32>
    %114 = tpu.matmul %113, %0, %cst_119 {dimension_numbers = #tpu.dot_dimension_numbers<[1], [0], [0], [1], [0, 0, 1, 1], [], []>} : vector<8x16xf32>, vector<16x32xf32>, vector<8x32xf32> -> vector<8x32xf32>
    %c0_120 = arith.constant 0 : index
    %c3_121 = arith.constant 3 : index
    %c0_122 = arith.constant 0 : index
    %c0_123 = arith.constant 0 : index
    %115 = vector.load %arg5[%c0_120, %c3_121, %c0_122, %c0_123] : memref<1x8x8x64xf32, #tpu.memory_space<vmem>>, vector<1x1x8x32xf32>
    %116 = vector.shape_cast %115 : vector<1x1x8x32xf32> to vector<8x32xf32>
    %117 = vector.shape_cast %114 : vector<8x32xf32> to vector<1x1x8x32xf32>
    tpu.vector_store %arg5[%c0_120, %c3_121, %c0_122, %c0_123], %117 {strides = array<i32>} : memref<1x8x8x64xf32, #tpu.memory_space<vmem>>, vector<1x1x8x32xf32>,
    %c0_124 = arith.constant 0 : index
    %c3_125 = arith.constant 3 : index
    %c0_126 = arith.constant 0 : index
    %c32_127 = arith.constant 32 : index
    %118 = vector.load %arg5[%c0_124, %c3_125, %c0_126, %c32_127] : memref<1x8x8x64xf32, #tpu.memory_space<vmem>>, vector<1x1x8x32xf32>
    %119 = vector.shape_cast %118 : vector<1x1x8x32xf32> to vector<8x32xf32>
    %120 = vector.shape_cast %114 : vector<8x32xf32> to vector<1x1x8x32xf32>
    tpu.vector_store %arg5[%c0_124, %c3_125, %c0_126, %c32_127], %120 {strides = array<i32>} : memref<1x8x8x64xf32, #tpu.memory_space<vmem>>, vector<1x1x8x32xf32>,
    %c4 = arith.constant 4 : index
    %c0_128 = arith.constant 0 : index
    %121 = memref.load %arg3[%c4, %c0_128] : memref<8x4xf32, #tpu.memory_space<smem>>
    %c0_129 = arith.constant 0 : index
    %c0_130 = arith.constant 0 : index
    %c0_131 = arith.constant 0 : index
    %c0_132 = arith.constant 0 : index
    %122 = vector.load %arg2[%c0_129, %c0_130, %c0_131, %c0_132] : memref<1x4x8x16xf32, #tpu.memory_space<vmem>>, vector<1x1x8x16xf32>
    %123 = vector.shape_cast %122 : vector<1x1x8x16xf32> to vector<8x16xf32>
    %124 = vector.broadcast %121 : f32 to vector<8x16xf32>
    %125 = arith.mulf %124, %123 : vector<8x16xf32>
    %c4_133 = arith.constant 4 : index
    %c1_134 = arith.constant 1 : index
    %126 = memref.load %arg3[%c4_133, %c1_134] : memref<8x4xf32, #tpu.memory_space<smem>>
    %c0_135 = arith.constant 0 : index
    %c1_136 = arith.constant 1 : index
    %c0_137 = arith.constant 0 : index
    %c0_138 = arith.constant 0 : index
    %127 = vector.load %arg2[%c0_135, %c1_136, %c0_137, %c0_138] : memref<1x4x8x16xf32, #tpu.memory_space<vmem>>, vector<1x1x8x16xf32>
    %128 = vector.shape_cast %127 : vector<1x1x8x16xf32> to vector<8x16xf32>
    %129 = vector.broadcast %126 : f32 to vector<8x16xf32>
    %130 = arith.mulf %129, %128 : vector<8x16xf32>
    %131 = arith.addf %125, %130 : vector<8x16xf32>
    %c4_139 = arith.constant 4 : index
    %c2_140 = arith.constant 2 : index
    %132 = memref.load %arg3[%c4_139, %c2_140] : memref<8x4xf32, #tpu.memory_space<smem>>
    %c0_141 = arith.constant 0 : index
    %c2_142 = arith.constant 2 : index
    %c0_143 = arith.constant 0 : index
    %c0_144 = arith.constant 0 : index
    %133 = vector.load %arg2[%c0_141, %c2_142, %c0_143, %c0_144] : memref<1x4x8x16xf32, #tpu.memory_space<vmem>>, vector<1x1x8x16xf32>
    %134 = vector.shape_cast %133 : vector<1x1x8x16xf32> to vector<8x16xf32>
    %135 = vector.broadcast %132 : f32 to vector<8x16xf32>
    %136 = arith.mulf %135, %134 : vector<8x16xf32>
    %137 = arith.addf %131, %136 : vector<8x16xf32>
    %c4_145 = arith.constant 4 : index
    %c3_146 = arith.constant 3 : index
    %138 = memref.load %arg3[%c4_145, %c3_146] : memref<8x4xf32, #tpu.memory_space<smem>>
    %c0_147 = arith.constant 0 : index
    %c3_148 = arith.constant 3 : index
    %c0_149 = arith.constant 0 : index
    %c0_150 = arith.constant 0 : index
    %139 = vector.load %arg2[%c0_147, %c3_148, %c0_149, %c0_150] : memref<1x4x8x16xf32, #tpu.memory_space<vmem>>, vector<1x1x8x16xf32>
    %140 = vector.shape_cast %139 : vector<1x1x8x16xf32> to vector<8x16xf32>
    %141 = vector.broadcast %138 : f32 to vector<8x16xf32>
    %142 = arith.mulf %141, %140 : vector<8x16xf32>
    %143 = arith.addf %137, %142 : vector<8x16xf32>
    %cst_151 = arith.constant dense<0.000000e+00> : vector<8x32xf32>
    %144 = tpu.matmul %143, %0, %cst_151 {dimension_numbers = #tpu.dot_dimension_numbers<[1], [0], [0], [1], [0, 0, 1, 1], [], []>} : vector<8x16xf32>, vector<16x32xf32>, vector<8x32xf32> -> vector<8x32xf32>
    %c0_152 = arith.constant 0 : index
    %c4_153 = arith.constant 4 : index
    %c0_154 = arith.constant 0 : index
    %c0_155 = arith.constant 0 : index
    %145 = vector.load %arg5[%c0_152, %c4_153, %c0_154, %c0_155] : memref<1x8x8x64xf32, #tpu.memory_space<vmem>>, vector<1x1x8x32xf32>
    %146 = vector.shape_cast %145 : vector<1x1x8x32xf32> to vector<8x32xf32>
    %147 = vector.shape_cast %144 : vector<8x32xf32> to vector<1x1x8x32xf32>
    tpu.vector_store %arg5[%c0_152, %c4_153, %c0_154, %c0_155], %147 {strides = array<i32>} : memref<1x8x8x64xf32, #tpu.memory_space<vmem>>, vector<1x1x8x32xf32>,
    %c0_156 = arith.constant 0 : index
    %c4_157 = arith.constant 4 : index
    %c0_158 = arith.constant 0 : index
    %c32_159 = arith.constant 32 : index
    %148 = vector.load %arg5[%c0_156, %c4_157, %c0_158, %c32_159] : memref<1x8x8x64xf32, #tpu.memory_space<vmem>>, vector<1x1x8x32xf32>
    %149 = vector.shape_cast %148 : vector<1x1x8x32xf32> to vector<8x32xf32>
    %150 = vector.shape_cast %144 : vector<8x32xf32> to vector<1x1x8x32xf32>
    tpu.vector_store %arg5[%c0_156, %c4_157, %c0_158, %c32_159], %150 {strides = array<i32>} : memref<1x8x8x64xf32, #tpu.memory_space<vmem>>, vector<1x1x8x32xf32>,
    %c5 = arith.constant 5 : index
    %c0_160 = arith.constant 0 : index
    %151 = memref.load %arg3[%c5, %c0_160] : memref<8x4xf32, #tpu.memory_space<smem>>
    %c0_161 = arith.constant 0 : index
    %c0_162 = arith.constant 0 : index
    %c0_163 = arith.constant 0 : index
    %c0_164 = arith.constant 0 : index
    %152 = vector.load %arg2[%c0_161, %c0_162, %c0_163, %c0_164] : memref<1x4x8x16xf32, #tpu.memory_space<vmem>>, vector<1x1x8x16xf32>
    %153 = vector.shape_cast %152 : vector<1x1x8x16xf32> to vector<8x16xf32>
    %154 = vector.broadcast %151 : f32 to vector<8x16xf32>
    %155 = arith.mulf %154, %153 : vector<8x16xf32>
    %c5_165 = arith.constant 5 : index
    %c1_166 = arith.constant 1 : index
    %156 = memref.load %arg3[%c5_165, %c1_166] : memref<8x4xf32, #tpu.memory_space<smem>>
    %c0_167 = arith.constant 0 : index
    %c1_168 = arith.constant 1 : index
    %c0_169 = arith.constant 0 : index
    %c0_170 = arith.constant 0 : index
    %157 = vector.load %arg2[%c0_167, %c1_168, %c0_169, %c0_170] : memref<1x4x8x16xf32, #tpu.memory_space<vmem>>, vector<1x1x8x16xf32>
    %158 = vector.shape_cast %157 : vector<1x1x8x16xf32> to vector<8x16xf32>
    %159 = vector.broadcast %156 : f32 to vector<8x16xf32>
    %160 = arith.mulf %159, %158 : vector<8x16xf32>
    %161 = arith.addf %155, %160 : vector<8x16xf32>
    %c5_171 = arith.constant 5 : index
    %c2_172 = arith.constant 2 : index
    %162 = memref.load %arg3[%c5_171, %c2_172] : memref<8x4xf32, #tpu.memory_space<smem>>
    %c0_173 = arith.constant 0 : index
    %c2_174 = arith.constant 2 : index
    %c0_175 = arith.constant 0 : index
    %c0_176 = arith.constant 0 : index
    %163 = vector.load %arg2[%c0_173, %c2_174, %c0_175, %c0_176] : memref<1x4x8x16xf32, #tpu.memory_space<vmem>>, vector<1x1x8x16xf32>
    %164 = vector.shape_cast %163 : vector<1x1x8x16xf32> to vector<8x16xf32>
    %165 = vector.broadcast %162 : f32 to vector<8x16xf32>
    %166 = arith.mulf %165, %164 : vector<8x16xf32>
    %167 = arith.addf %161, %166 : vector<8x16xf32>
    %c5_177 = arith.constant 5 : index
    %c3_178 = arith.constant 3 : index
    %168 = memref.load %arg3[%c5_177, %c3_178] : memref<8x4xf32, #tpu.memory_space<smem>>
    %c0_179 = arith.constant 0 : index
    %c3_180 = arith.constant 3 : index
    %c0_181 = arith.constant 0 : index
    %c0_182 = arith.constant 0 : index
    %169 = vector.load %arg2[%c0_179, %c3_180, %c0_181, %c0_182] : memref<1x4x8x16xf32, #tpu.memory_space<vmem>>, vector<1x1x8x16xf32>
    %170 = vector.shape_cast %169 : vector<1x1x8x16xf32> to vector<8x16xf32>
    %171 = vector.broadcast %168 : f32 to vector<8x16xf32>
    %172 = arith.mulf %171, %170 : vector<8x16xf32>
    %173 = arith.addf %167, %172 : vector<8x16xf32>
    %cst_183 = arith.constant dense<0.000000e+00> : vector<8x32xf32>
    %174 = tpu.matmul %173, %0, %cst_183 {dimension_numbers = #tpu.dot_dimension_numbers<[1], [0], [0], [1], [0, 0, 1, 1], [], []>} : vector<8x16xf32>, vector<16x32xf32>, vector<8x32xf32> -> vector<8x32xf32>
    %c0_184 = arith.constant 0 : index
    %c5_185 = arith.constant 5 : index
    %c0_186 = arith.constant 0 : index
    %c0_187 = arith.constant 0 : index
    %175 = vector.load %arg5[%c0_184, %c5_185, %c0_186, %c0_187] : memref<1x8x8x64xf32, #tpu.memory_space<vmem>>, vector<1x1x8x32xf32>
    %176 = vector.shape_cast %175 : vector<1x1x8x32xf32> to vector<8x32xf32>
    %177 = vector.shape_cast %174 : vector<8x32xf32> to vector<1x1x8x32xf32>
    tpu.vector_store %arg5[%c0_184, %c5_185, %c0_186, %c0_187], %177 {strides = array<i32>} : memref<1x8x8x64xf32, #tpu.memory_space<vmem>>, vector<1x1x8x32xf32>,
    %c0_188 = arith.constant 0 : index
    %c5_189 = arith.constant 5 : index
    %c0_190 = arith.constant 0 : index
    %c32_191 = arith.constant 32 : index
    %178 = vector.load %arg5[%c0_188, %c5_189, %c0_190, %c32_191] : memref<1x8x8x64xf32, #tpu.memory_space<vmem>>, vector<1x1x8x32xf32>
    %179 = vector.shape_cast %178 : vector<1x1x8x32xf32> to vector<8x32xf32>
    %180 = vector.shape_cast %174 : vector<8x32xf32> to vector<1x1x8x32xf32>
    tpu.vector_store %arg5[%c0_188, %c5_189, %c0_190, %c32_191], %180 {strides = array<i32>} : memref<1x8x8x64xf32, #tpu.memory_space<vmem>>, vector<1x1x8x32xf32>,
    %c6 = arith.constant 6 : index
    %c0_192 = arith.constant 0 : index
    %181 = memref.load %arg3[%c6, %c0_192] : memref<8x4xf32, #tpu.memory_space<smem>>
    %c0_193 = arith.constant 0 : index
    %c0_194 = arith.constant 0 : index
    %c0_195 = arith.constant 0 : index
    %c0_196 = arith.constant 0 : index
    %182 = vector.load %arg2[%c0_193, %c0_194, %c0_195, %c0_196] : memref<1x4x8x16xf32, #tpu.memory_space<vmem>>, vector<1x1x8x16xf32>
    %183 = vector.shape_cast %182 : vector<1x1x8x16xf32> to vector<8x16xf32>
    %184 = vector.broadcast %181 : f32 to vector<8x16xf32>
    %185 = arith.mulf %184, %183 : vector<8x16xf32>
    %c6_197 = arith.constant 6 : index
    %c1_198 = arith.constant 1 : index
    %186 = memref.load %arg3[%c6_197, %c1_198] : memref<8x4xf32, #tpu.memory_space<smem>>
    %c0_199 = arith.constant 0 : index
    %c1_200 = arith.constant 1 : index
    %c0_201 = arith.constant 0 : index
    %c0_202 = arith.constant 0 : index
    %187 = vector.load %arg2[%c0_199, %c1_200, %c0_201, %c0_202] : memref<1x4x8x16xf32, #tpu.memory_space<vmem>>, vector<1x1x8x16xf32>
    %188 = vector.shape_cast %187 : vector<1x1x8x16xf32> to vector<8x16xf32>
    %189 = vector.broadcast %186 : f32 to vector<8x16xf32>
    %190 = arith.mulf %189, %188 : vector<8x16xf32>
    %191 = arith.addf %185, %190 : vector<8x16xf32>
    %c6_203 = arith.constant 6 : index
    %c2_204 = arith.constant 2 : index
    %192 = memref.load %arg3[%c6_203, %c2_204] : memref<8x4xf32, #tpu.memory_space<smem>>
    %c0_205 = arith.constant 0 : index
    %c2_206 = arith.constant 2 : index
    %c0_207 = arith.constant 0 : index
    %c0_208 = arith.constant 0 : index
    %193 = vector.load %arg2[%c0_205, %c2_206, %c0_207, %c0_208] : memref<1x4x8x16xf32, #tpu.memory_space<vmem>>, vector<1x1x8x16xf32>
    %194 = vector.shape_cast %193 : vector<1x1x8x16xf32> to vector<8x16xf32>
    %195 = vector.broadcast %192 : f32 to vector<8x16xf32>
    %196 = arith.mulf %195, %194 : vector<8x16xf32>
    %197 = arith.addf %191, %196 : vector<8x16xf32>
    %c6_209 = arith.constant 6 : index
    %c3_210 = arith.constant 3 : index
    %198 = memref.load %arg3[%c6_209, %c3_210] : memref<8x4xf32, #tpu.memory_space<smem>>
    %c0_211 = arith.constant 0 : index
    %c3_212 = arith.constant 3 : index
    %c0_213 = arith.constant 0 : index
    %c0_214 = arith.constant 0 : index
    %199 = vector.load %arg2[%c0_211, %c3_212, %c0_213, %c0_214] : memref<1x4x8x16xf32, #tpu.memory_space<vmem>>, vector<1x1x8x16xf32>
    %200 = vector.shape_cast %199 : vector<1x1x8x16xf32> to vector<8x16xf32>
    %201 = vector.broadcast %198 : f32 to vector<8x16xf32>
    %202 = arith.mulf %201, %200 : vector<8x16xf32>
    %203 = arith.addf %197, %202 : vector<8x16xf32>
    %cst_215 = arith.constant dense<0.000000e+00> : vector<8x32xf32>
    %204 = tpu.matmul %203, %0, %cst_215 {dimension_numbers = #tpu.dot_dimension_numbers<[1], [0], [0], [1], [0, 0, 1, 1], [], []>} : vector<8x16xf32>, vector<16x32xf32>, vector<8x32xf32> -> vector<8x32xf32>
    %c0_216 = arith.constant 0 : index
    %c6_217 = arith.constant 6 : index
    %c0_218 = arith.constant 0 : index
    %c0_219 = arith.constant 0 : index
    %205 = vector.load %arg5[%c0_216, %c6_217, %c0_218, %c0_219] : memref<1x8x8x64xf32, #tpu.memory_space<vmem>>, vector<1x1x8x32xf32>
    %206 = vector.shape_cast %205 : vector<1x1x8x32xf32> to vector<8x32xf32>
    %207 = vector.shape_cast %204 : vector<8x32xf32> to vector<1x1x8x32xf32>
    tpu.vector_store %arg5[%c0_216, %c6_217, %c0_218, %c0_219], %207 {strides = array<i32>} : memref<1x8x8x64xf32, #tpu.memory_space<vmem>>, vector<1x1x8x32xf32>,
    %c0_220 = arith.constant 0 : index
    %c6_221 = arith.constant 6 : index
    %c0_222 = arith.constant 0 : index
    %c32_223 = arith.constant 32 : index
    %208 = vector.load %arg5[%c0_220, %c6_221, %c0_222, %c32_223] : memref<1x8x8x64xf32, #tpu.memory_space<vmem>>, vector<1x1x8x32xf32>
    %209 = vector.shape_cast %208 : vector<1x1x8x32xf32> to vector<8x32xf32>
    %210 = vector.shape_cast %204 : vector<8x32xf32> to vector<1x1x8x32xf32>
    tpu.vector_store %arg5[%c0_220, %c6_221, %c0_222, %c32_223], %210 {strides = array<i32>} : memref<1x8x8x64xf32, #tpu.memory_space<vmem>>, vector<1x1x8x32xf32>,
    %c7 = arith.constant 7 : index
    %c0_224 = arith.constant 0 : index
    %211 = memref.load %arg3[%c7, %c0_224] : memref<8x4xf32, #tpu.memory_space<smem>>
    %c0_225 = arith.constant 0 : index
    %c0_226 = arith.constant 0 : index
    %c0_227 = arith.constant 0 : index
    %c0_228 = arith.constant 0 : index
    %212 = vector.load %arg2[%c0_225, %c0_226, %c0_227, %c0_228] : memref<1x4x8x16xf32, #tpu.memory_space<vmem>>, vector<1x1x8x16xf32>
    %213 = vector.shape_cast %212 : vector<1x1x8x16xf32> to vector<8x16xf32>
    %214 = vector.broadcast %211 : f32 to vector<8x16xf32>
    %215 = arith.mulf %214, %213 : vector<8x16xf32>
    %c7_229 = arith.constant 7 : index
    %c1_230 = arith.constant 1 : index
    %216 = memref.load %arg3[%c7_229, %c1_230] : memref<8x4xf32, #tpu.memory_space<smem>>
    %c0_231 = arith.constant 0 : index
    %c1_232 = arith.constant 1 : index
    %c0_233 = arith.constant 0 : index
    %c0_234 = arith.constant 0 : index
    %217 = vector.load %arg2[%c0_231, %c1_232, %c0_233, %c0_234] : memref<1x4x8x16xf32, #tpu.memory_space<vmem>>, vector<1x1x8x16xf32>
    %218 = vector.shape_cast %217 : vector<1x1x8x16xf32> to vector<8x16xf32>
    %219 = vector.broadcast %216 : f32 to vector<8x16xf32>
    %220 = arith.mulf %219, %218 : vector<8x16xf32>
    %221 = arith.addf %215, %220 : vector<8x16xf32>
    %c7_235 = arith.constant 7 : index
    %c2_236 = arith.constant 2 : index
    %222 = memref.load %arg3[%c7_235, %c2_236] : memref<8x4xf32, #tpu.memory_space<smem>>
    %c0_237 = arith.constant 0 : index
    %c2_238 = arith.constant 2 : index
    %c0_239 = arith.constant 0 : index
    %c0_240 = arith.constant 0 : index
    %223 = vector.load %arg2[%c0_237, %c2_238, %c0_239, %c0_240] : memref<1x4x8x16xf32, #tpu.memory_space<vmem>>, vector<1x1x8x16xf32>
    %224 = vector.shape_cast %223 : vector<1x1x8x16xf32> to vector<8x16xf32>
    %225 = vector.broadcast %222 : f32 to vector<8x16xf32>
    %226 = arith.mulf %225, %224 : vector<8x16xf32>
    %227 = arith.addf %221, %226 : vector<8x16xf32>
    %c7_241 = arith.constant 7 : index
    %c3_242 = arith.constant 3 : index
    %228 = memref.load %arg3[%c7_241, %c3_242] : memref<8x4xf32, #tpu.memory_space<smem>>
    %c0_243 = arith.constant 0 : index
    %c3_244 = arith.constant 3 : index
    %c0_245 = arith.constant 0 : index
    %c0_246 = arith.constant 0 : index
    %229 = vector.load %arg2[%c0_243, %c3_244, %c0_245, %c0_246] : memref<1x4x8x16xf32, #tpu.memory_space<vmem>>, vector<1x1x8x16xf32>
    %230 = vector.shape_cast %229 : vector<1x1x8x16xf32> to vector<8x16xf32>
    %231 = vector.broadcast %228 : f32 to vector<8x16xf32>
    %232 = arith.mulf %231, %230 : vector<8x16xf32>
    %233 = arith.addf %227, %232 : vector<8x16xf32>
    %cst_247 = arith.constant dense<0.000000e+00> : vector<8x32xf32>
    %234 = tpu.matmul %233, %0, %cst_247 {dimension_numbers = #tpu.dot_dimension_numbers<[1], [0], [0], [1], [0, 0, 1, 1], [], []>} : vector<8x16xf32>, vector<16x32xf32>, vector<8x32xf32> -> vector<8x32xf32>
    %c0_248 = arith.constant 0 : index
    %c7_249 = arith.constant 7 : index
    %c0_250 = arith.constant 0 : index
    %c0_251 = arith.constant 0 : index
    %235 = vector.load %arg5[%c0_248, %c7_249, %c0_250, %c0_251] : memref<1x8x8x64xf32, #tpu.memory_space<vmem>>, vector<1x1x8x32xf32>
    %236 = vector.shape_cast %235 : vector<1x1x8x32xf32> to vector<8x32xf32>
    %237 = vector.shape_cast %234 : vector<8x32xf32> to vector<1x1x8x32xf32>
    tpu.vector_store %arg5[%c0_248, %c7_249, %c0_250, %c0_251], %237 {strides = array<i32>} : memref<1x8x8x64xf32, #tpu.memory_space<vmem>>, vector<1x1x8x32xf32>,
    %c0_252 = arith.constant 0 : index
    %c7_253 = arith.constant 7 : index
    %c0_254 = arith.constant 0 : index
    %c32_255 = arith.constant 32 : index
    %238 = vector.load %arg5[%c0_252, %c7_253, %c0_254, %c32_255] : memref<1x8x8x64xf32, #tpu.memory_space<vmem>>, vector<1x1x8x32xf32>
    %239 = vector.shape_cast %238 : vector<1x1x8x32xf32> to vector<8x32xf32>
    %240 = vector.shape_cast %234 : vector<8x32xf32> to vector<1x1x8x32xf32>
    tpu.vector_store %arg5[%c0_252, %c7_253, %c0_254, %c32_255], %240 {strides = array<i32>} : memref<1x8x8x64xf32, #tpu.memory_space<vmem>>, vector<1x1x8x32xf32>,
    return
  }
  func.func @transform_0(%arg0: i32, %arg1: i32) -> (i32, i32, i32, i32) {
    %c0_i32 = arith.constant 0 : i32
    %c0_i32_0 = arith.constant 0 : i32
    %c0_i32_1 = arith.constant 0 : i32
    return %arg0, %c0_i32, %arg1, %c0_i32_0 : i32, i32, i32, i32
  }
  func.func @transform_1(%arg0: i32, %arg1: i32) -> (i32, i32) {
    %c0_i32 = arith.constant 0 : i32
    %c0_i32_0 = arith.constant 0 : i32
    %c0_i32_1 = arith.constant 0 : i32
    return %c0_i32, %c0_i32_0 : i32, i32
  }
  func.func @transform_2(%arg0: i32, %arg1: i32) -> (i32, i32) {
    %c0_i32 = arith.constant 0 : i32
    %c0_i32_0 = arith.constant 0 : i32
    %c0_i32_1 = arith.constant 0 : i32
    return %c0_i32, %c0_i32_0 : i32, i32
  }
  func.func @transform_3(%arg0: i32, %arg1: i32) -> (i32, i32, i32, i32) {
    %c0_i32 = arith.constant 0 : i32
    %c0_i32_0 = arith.constant 0 : i32
    %c0_i32_1 = arith.constant 0 : i32
    return %arg0, %c0_i32, %arg1, %c0_i32_0 : i32, i32, i32, i32
  }
}

</mosaic_0001>

<llo_original>
// kernel: tpu_custom_call.1
$region0: #{tpu_custom_call.1}
  #allocation0 [shape = 'u32[]', space=smem, size = 0x4, offset = 0x4, fixed_abs, tag = 'smem constant byte address 0x4 - core index']
  #allocation1 [shape = 'u32[144,128]{1,0:T(1,128)}', space=vmem, size = 0x12000, scoped, tag = 'internal scratch']
  %s0 = inlined_call_operand.hbm [shape: f32[2,4,16,16], index: 0, kind: input, shape index: {}]
  %s1 = inlined_call_operand.vmem [shape: f32[8,4], index: 1, kind: input, shape index: {}]
  %s2 = inlined_call_operand.vmem [shape: f32[16,32], index: 2, kind: input, shape index: {}]
  %s3 = inlined_call_operand.hbm [shape: f32[2,8,16,64], index: 3, kind: output, shape index: {}]
  %s4 = sld [smem:[#allocation0]]
  $region53: #{tpu_custom_call.1} parent=0
    _
  %s6 = ssub.s32 1, %s4
  %s7 = scalar_select 0, %s6, %s4
  $region1: #{tpu_custom_call.1} parent=0
    #allocation2 [shape = 'u8[32768]{0}', space=vmem, size = 0x8000, scoped, tag = 'input window, operand 0']
    #allocation3 [shape = 's32[2]{0}', space=sflag, size = 0x8, scoped, tag = 'scoped memory for tpu_custom_call.1']
    #allocation4 [shape = 's32[2]{0}', space=sflag, size = 0x8, scoped, tag = 'scoped memory for tpu_custom_call.1']
    #allocation5 [shape = 's32[2]{0}', space=sflag, size = 0x8, scoped, tag = 'scoped memory for tpu_custom_call.1']
    #allocation6 [shape = 'u8[4096]{0}', space=smem, size = 0x1000, scoped, tag = 'input window, operand 1, single buffered']
    #allocation7 [shape = 'u8[65536]{0}', space=vmem, size = 0x10000, scoped, tag = 'output window, operand 0']
    %8 = vsyncpa [#allocation3], 0
    %s9 = scalar_lea.sflag [#allocation3], 1
    %10 = vsyncpa %s9, 0
    %11 = vsyncpa [#allocation5], 0
    %12 = vsyncpa [#allocation4], 0
    %s13 = scalar_lea.sflag [#allocation4], 1
    %14 = vsyncpa %s13, 0
    loop: start=0, step=1, limit=6
    $region2: #{tpu_custom_call.1} parent=1 // loop_pre_header
      _
    $region3: #{tpu_custom_call.1} parent=1 // loop_header
      %s16 = sphi 0, %s20
      %p17 = scmp.ge.s32.totalorder %s16, 6
      %s23 = sphi 0, %s35
      %s24 = sphi 0, %s31
      %s25 = sphi 0, %s23
      %s26 = sphi 0, %s24
      %s27 = sphi 0, %s25
      %s28 = sphi 0, %s26
      %s40 = sphi 0, %s42
      %s43 = sphi 0, %s40
      %s44 = sphi 0, %s43
      %s60 = sphi 0, %s44
      %s64 = sphi 0, %s64
      %s66 = sphi 0, %s64
      %s67 = sphi 0, %s66
      %s81 = sphi 0, %s67
      %s85 = sphi 0, %s85
      %s87 = sphi 0, %s85
      %s88 = sphi 0, %s87
      %s102 = sphi 0, %s88
      %s110 = sphi 0, %s112
      %s113 = sphi 0, %s110
      %s114 = sphi 0, %s113
      %s130 = sphi 0, %s114
    $region4: #{tpu_custom_call.1} parent=1 // loop_header_branch
      %19 = sbr.rel (%p17) target = $region8
    $region5: #{tpu_custom_call.1} parent=1 // loop_body
      %s21 = ssub.s32 %s16, 1
      %s22 = ssub.s32 %s16, 2
      %s29 = sadd.s32 1, %s24
      %p30 = scmp.ge.s32.totalorder %s29, 2
      %s31 = scalar_select %p30, 0, %s29
      %s32 = sadd.s32 1, %s23
      %s33 = scalar_select %p30, %s32, %s23
      %p34 = scmp.ge.s32.totalorder %s33, 2
      %s35 = scalar_select %p34, 0, %s33
      %s36 = ssub.s32 %s23, %s35
      %s37 = ssub.s32 %s24, %s31
      %s38 = sor.u32 %s36, %s37
      %p39 = scmp.eq.s32.totalorder %s38, 0
      %s41 = sadd.s32 %s40, 1
      %s42 = scalar_select %p39, %s40, %s41
      %p45 = pneg %p39
      %p46 = scmp.eq.s32.totalorder %s16, 3
      %p47 = por %p45, %p46
      %p48 = scmp.ne.s32.totalorder %s40, %s43
      %p49 = scmp.eq.s32.totalorder %s16, 0
      %p50 = por %p48, %p49
      %p51 = scmp.ne.s32.totalorder %s40, %s43
      %p52 = scmp.eq.s32.totalorder %s21, 3
      %p53 = por %p51, %p52
      %p54 = scmp.ne.s32.totalorder %s43, %s44
      %p55 = scmp.eq.s32.totalorder %s21, 0
      %p56 = por %p54, %p55
      %p57 = scmp.ne.s32.totalorder %s43, %s44
      %p58 = scmp.eq.s32.totalorder %s22, 3
      %p59 = por %p57, %p58
      %p61 = scmp.ne.s32.totalorder %s44, %s60
      %p62 = scmp.eq.s32.totalorder %s22, 0
      %p63 = por %p61, %p62
      %s65 = sadd.s32 %s64, 1
      %p68 = scmp.eq.s32.totalorder %s16, 3
      %p69 = scmp.ne.s32.totalorder %s64, %s66
      %p70 = scmp.eq.s32.totalorder %s16, 0
      %p71 = por %p69, %p70
      %p72 = scmp.ne.s32.totalorder %s64, %s66
      %p73 = scmp.eq.s32.totalorder %s21, 3
      %p74 = por %p72, %p73
      %p75 = scmp.ne.s32.totalorder %s66, %s67
      %p76 = scmp.eq.s32.totalorder %s21, 0
      %p77 = por %p75, %p76
      %p78 = scmp.ne.s32.totalorder %s66, %s67
      %p79 = scmp.eq.s32.totalorder %s22, 3
      %p80 = por %p78, %p79
      %p82 = scmp.ne.s32.totalorder %s67, %s81
      %p83 = scmp.eq.s32.totalorder %s22, 0
      %p84 = por %p82, %p83
      %s86 = sadd.s32 %s85, 1
      %p89 = scmp.eq.s32.totalorder %s16, 3
      %p90 = scmp.ne.s32.totalorder %s85, %s87
      %p91 = scmp.eq.s32.totalorder %s16, 0
      %p92 = por %p90, %p91
      %p93 = scmp.ne.s32.totalorder %s85, %s87
      %p94 = scmp.eq.s32.totalorder %s21, 3
      %p95 = por %p93, %p94
      %p96 = scmp.ne.s32.totalorder %s87, %s88
      %p97 = scmp.eq.s32.totalorder %s21, 0
      %p98 = por %p96, %p97
      %p99 = scmp.ne.s32.totalorder %s87, %s88
      %p100 = scmp.eq.s32.totalorder %s22, 3
      %p101 = por %p99, %p100
      %p103 = scmp.ne.s32.totalorder %s88, %s102
      %p104 = scmp.eq.s32.totalorder %s22, 0
      %p105 = por %p103, %p104
      %s106 = ssub.s32 %s23, %s35
      %s107 = ssub.s32 %s24, %s31
      %s108 = sor.u32 %s106, %s107
      %p109 = scmp.eq.s32.totalorder %s108, 0
      %s111 = sadd.s32 %s110, 1
      %s112 = scalar_select %p109, %s110, %s111
      %p115 = pneg %p109
      %p116 = scmp.eq.s32.totalorder %s16, 3
      %p117 = por %p115, %p116
      %p118 = scmp.ne.s32.totalorder %s110, %s113
      %p119 = scmp.eq.s32.totalorder %s16, 0
      %p120 = por %p118, %p119
      %p121 = scmp.ne.s32.totalorder %s110, %s113
      %p122 = scmp.eq.s32.totalorder %s21, 3
      %p123 = por %p121, %p122
      %p124 = scmp.ne.s32.totalorder %s113, %s114
      %p125 = scmp.eq.s32.totalorder %s21, 0
      %p126 = por %p124, %p125
      %p127 = scmp.ne.s32.totalorder %s113, %s114
      %p128 = scmp.eq.s32.totalorder %s22, 3
      %p129 = por %p127, %p128
      %p131 = scmp.ne.s32.totalorder %s114, %s130
      %p132 = scmp.eq.s32.totalorder %s22, 0
      %p133 = por %p131, %p132
      %p134 = scmp.le.s32.totalorder 1, %s16
      %p135 = scmp.lt.s32.totalorder %s16, 5
      %p136 = pnand %p134, %p135
      %p137 = pneg %p136
      // Predicated region
      $region9: #{tpu_custom_call.1} parent=5 // pred_check
        _
      $region10: #{tpu_custom_call.1} parent=5 // pred_check_branch
        %139 = sbr.rel (%p136) target = $region12
      $region11: #{tpu_custom_call.1} parent=5 // pred_region
        %s140 = ssub.s32 %s16, 1
        // Predicated region
        $region13: #{tpu_custom_call.1} parent=11 // pred_check
          %p141 = pneg %p77
        $region14: #{tpu_custom_call.1} parent=11 // pred_check_branch
          %143 = sbr.rel (%p141) target = $region16
        $region15: #{tpu_custom_call.1} parent=11 // pred_region
          %s145 = ssub.s32 128, 128
          %146 = vsyncadd [#allocation5], %s145
          %s148 = sshll.u32 %s1, 4
          %s149 = int_to_ptr.vmem [resolvable:$true] %s148
          %151 = dma.vmem_to_smem %s149, 128, [#allocation6], [#allocation5]
        $region16: #{tpu_custom_call.1} parent=11 // pred_fallthru
          _
        // Predicated region
        $region17: #{tpu_custom_call.1} parent=11 // pred_check
          %p152 = pneg %p98
        $region18: #{tpu_custom_call.1} parent=11 // pred_check_branch
          %154 = sbr.rel (%p152) target = $region20
        $region19: #{tpu_custom_call.1} parent=11 // pred_region
          _
        $region20: #{tpu_custom_call.1} parent=11 // pred_fallthru
          _
      $region12: #{tpu_custom_call.1} parent=5 // pred_fallthru
        _
      %p155 = scmp.lt.s32.totalorder %s16, 4
      // Predicated region
      $region21: #{tpu_custom_call.1} parent=5 // pred_check
        %p156 = pneg %p155
      $region22: #{tpu_custom_call.1} parent=5 // pred_check_branch
        %158 = sbr.rel (%p156) target = $region24
      $region23: #{tpu_custom_call.1} parent=5 // pred_region
        // Predicated region
        $region25: #{tpu_custom_call.1} parent=23 // pred_check
          %p159 = pneg %p50
        $region26: #{tpu_custom_call.1} parent=23 // pred_check_branch
          %161 = sbr.rel (%p159) target = $region28
        $region27: #{tpu_custom_call.1} parent=23 // pred_region
          %s162 = sand.u32 %s40, 1
          %s163 = scalar_lea.sflag [#allocation3], %s162
          %s164 = sand.u32 %s40, 1
          %s165 = smul.addr %s164, 32
          %s166 = scalar_lea.vmem [#allocation2], %s165
          %s168 = ssub.s32 512, 512
          %169 = vsyncadd %s163, %s168
          %s170 = smul.addr %s23, 8
          %s171 = sadd.s32 %s24, %s170
          %s172 = smul.addr %s171, 128
          %s173 = scalar_lea.hbm %s0, %s172
          %s174 = sshll.u32 %s166, 4
          %s175 = int_to_ptr.vmem [resolvable:$true] %s174
          %180 = dma.hbm_to_vmem [thread:$0]  %s173, 512, %s175, %s163, 256, 128, 8
        $region28: #{tpu_custom_call.1} parent=23 // pred_fallthru
          _
      $region24: #{tpu_custom_call.1} parent=5 // pred_fallthru
        _
      %p181 = scmp.le.s32.totalorder 1, %s16
      %p182 = scmp.lt.s32.totalorder %s16, 5
      %p183 = pnand %p181, %p182
      %p184 = pneg %p183
      // Predicated region
      $region29: #{tpu_custom_call.1} parent=5 // pred_check
        _
      $region30: #{tpu_custom_call.1} parent=5 // pred_check_branch
        %186 = sbr.rel (%p183) target = $region32
      $region31: #{tpu_custom_call.1} parent=5 // pred_region
        %s187 = ssub.s32 %s16, 1
        %s188 = sand.u32 %s43, 1
        %s189 = scalar_lea.sflag [#allocation3], %s188
        %s190 = sand.u32 %s43, 1
        %s191 = smul.addr %s190, 32
        %s192 = scalar_lea.vmem [#allocation2], %s191
        // Predicated region
        $region33: #{tpu_custom_call.1} parent=31 // pred_check
          %p193 = pneg %p56
        $region34: #{tpu_custom_call.1} parent=31 // pred_check_branch
          %195 = sbr.rel (%p193) target = $region36
        $region35: #{tpu_custom_call.1} parent=31 // pred_region
          %196 = dma.done %s189, 512
        $region36: #{tpu_custom_call.1} parent=31 // pred_fallthru
          _
        // Predicated region
        $region37: #{tpu_custom_call.1} parent=31 // pred_check
          %p197 = pneg %p77
        $region38: #{tpu_custom_call.1} parent=31 // pred_check_branch
          %199 = sbr.rel (%p197) target = $region40
        $region39: #{tpu_custom_call.1} parent=31 // pred_region
          %200 = dma.done [#allocation5], 128
        $region40: #{tpu_custom_call.1} parent=31 // pred_fallthru
          _
        %201 = sfence
        %s202 = sand.u32 %s43, 1
        %s203 = scalar_lea.sflag [#allocation3], %s202
        %s204 = sand.u32 %s43, 1
        %s205 = smul.addr %s204, 32
        %s206 = scalar_lea.vmem [#allocation2], %s205
        %p207 = pneg %p56
        %p208 = pneg %p53
        %p209 = pneg %p77
        %p210 = pneg %p74
        %p211 = pneg %p98
        %p212 = pneg %p95
        %p213 = pneg %p126
        %p214 = pneg %p123
        %s215 = sand.u32 %s113, 1
        %s216 = scalar_lea.sflag [#allocation4], %s215
        %s217 = sand.u32 %s113, 1
        %s218 = smul.addr %s217, 64
        %s219 = scalar_lea.vmem [#allocation7], %s218
        %v220 = vld [vmem:[%s2] sm:$0xff]
        %v221 = vld [vmem:[%s2 + $0x8] sm:$0xff]
        %s222 = sld [smem:[#allocation6]]
        %v223 = vld [vmem:[%s192] sm:$0xff]
        %v224 = vstv %s222
        %v225 = vmul.f32 %v224, %v223
        %s226 = sld [smem:[#allocation6 + $0x1]]
        %s227 = scalar_lea.vmem %s192, 8 [#allocation2]
        %v228 = vld [vmem:[%s227] sm:$0xff]
        %v229 = vstv %s226
        %v230 = vmul.f32 %v229, %v228
        %v231 = vadd.f32 %v225, %v230
        %s232 = sld [smem:[#allocation6 + $0x2]]
        %s233 = scalar_lea.vmem %s192, 16 [#allocation2]
        %v234 = vld [vmem:[%s233] sm:$0xff]
        %v235 = vstv %s232
        %v236 = vmul.f32 %v235, %v234
        %v237 = vadd.f32 %v231, %v236
        %s238 = sld [smem:[#allocation6 + $0x3]]
        %s239 = scalar_lea.vmem %s192, 24 [#allocation2]
        %v240 = vld [vmem:[%s239] sm:$0xff]
        %v241 = vstv %s238
        %v242 = vmul.f32 %v241, %v240
        %v243 = vadd.f32 %v237, %v242
        %vm244 = vcmask 130048
        %v246 = vsel %vm244, %v243, 0
        %248 = vmatprep.subr.mxu0 0.0
        %249 = vmatpush1.msra.mxu0 %v220
        %250 = vmatprep.subr.mxu0 0.0
        %251 = vmatpush1.msra.mxu0 %v221
        %252 = vmatprep.subr.mxu0 0.0
        %253 = vmatpush1.msra.mxu0 0.0
        %254 = vmatprep.subr.mxu0 0.0
        %255 = vmatpush1.msra.mxu0 0.0
        %256 = vmatprep.subr.mxu0 0.0
        %257 = vmatpush1.msra.mxu0 0.0
        %258 = vmatprep.subr.mxu0 0.0
        %259 = vmatpush1.msra.mxu0 0.0
        %260 = vmatprep.subr.mxu0 0.0
        %261 = vmatpush1.msra.mxu0 0.0
        %262 = vmatprep.subr.mxu0 0.0
        %263 = vmatpush1.msra.mxu0 0.0
        %264 = vmatprep.subr.mxu0 0.0
        %265 = vmatpush1.msra.mxu0 0.0
        %266 = vmatprep.subr.mxu0 0.0
        %267 = vmatpush1.msra.mxu0 0.0
        %268 = vmatprep.subr.mxu0 0.0
        %269 = vmatpush1.msra.mxu0 0.0
        %270 = vmatprep.subr.mxu0 0.0
        %271 = vmatpush1.msra.mxu0 0.0
        %272 = vmatprep.subr.mxu0 0.0
        %273 = vmatpush1.msra.mxu0 0.0
        %274 = vmatprep.subr.mxu0 0.0
        %275 = vmatpush1.msra.mxu0 0.0
        %276 = vmatprep.subr.mxu0 0.0
        %277 = vmatpush1.msra.mxu0 0.0
        %278 = vmatprep.subr.mxu0 0.0
        %279 = vmatpush1.msra.mxu0 0.0
        %280 = vmatprep.subr.mxu0 0.0
        %281 = vmatpush1.msra.mxu0 0.0
        %282 = vmatprep.subr.mxu0 0.0
        %283 = vmatpush1.msra.mxu0 0.0
        %284 = vmatprep.subr.mxu0 0.0
        %285 = vmatpush1.msra.mxu0 0.0
        %286 = vmatprep.subr.mxu0 0.0
        %287 = vmatpush1.msra.mxu0 0.0
        %288 = vmatprep.subr.mxu0 0.0
        %289 = vmatpush1.msra.mxu0 0.0
        %290 = vmatprep.subr.mxu0 0.0
        %291 = vmatpush1.msra.mxu0 0.0
        %292 = vmatprep.subr.mxu0 0.0
        %293 = vmatpush1.msra.mxu0 0.0
        %294 = vmatprep.subr.mxu0 0.0
        %295 = vmatpush1.msra.mxu0 0.0
        %296 = vmatprep.subr.mxu0 0.0
        %297 = vmatpush1.msra.mxu0 0.0
        %298 = vmatprep.subr.mxu0 0.0
        %299 = vmatpush1.msra.mxu0 0.0
        %300 = vmatprep.subr.mxu0 0.0
        %301 = vmatpush1.msra.mxu0 0.0
        %302 = vmatprep.subr.mxu0 0.0
        %303 = vmatpush1.msra.mxu0 0.0
        %304 = vmatprep.subr.mxu0 0.0
        %305 = vmatpush1.msra.mxu0 0.0
        %306 = vmatprep.subr.mxu0 0.0
        %307 = vmatpush1.msra.mxu0 0.0
        %308 = vmatprep.subr.mxu0 0.0
        %309 = vmatpush1.msra.mxu0 0.0
        %310 = vmatprep.subr.mxu0 0.0
        %311 = vmatpush1.msra.mxu0 0.0
        %312 = vmatprep.mubr.f32.mxu0 0.0
        %313 = vmatmul.mubr.f32.gmra.mrb[0].mxu0 %v246
        %v314 = vpop.f32.mrb[0].mxu0
        %v315 = vadd.f32 0.0, %v314
        %v316 = vpop.f32.mrb[0].mxu0
        %317 = vdwg.mxu0
        %vm318 = vcmask 261120
        %319 = vst.msk [vmem:[%s219] sm:$0xff] %vm318, %v315
        %321 = vrot.lane.b32.xlu0 %v315, 32
        %v322 = vpop.permute.xlu0 %321
        %vm324 = vcmask 523520
        %325 = vst.msk [vmem:[%s219] sm:$0xff] %vm324, %v322
        %s326 = sld [smem:[#allocation6 + $0x80]]
        %v327 = vld [vmem:[%s192] sm:$0xff]
        %v328 = vstv %s326
        %v329 = vmul.f32 %v328, %v327
        %s330 = sld [smem:[#allocation6 + $0x81]]
        %v331 = vld [vmem:[%s227] sm:$0xff]
        %v332 = vstv %s330
        %v333 = vmul.f32 %v332, %v331
        %v334 = vadd.f32 %v329, %v333
        %s335 = sld [smem:[#allocation6 + $0x82]]
        %v336 = vld [vmem:[%s233] sm:$0xff]
        %v337 = vstv %s335
        %v338 = vmul.f32 %v337, %v336
        %v339 = vadd.f32 %v334, %v338
        %s340 = sld [smem:[#allocation6 + $0x83]]
        %v341 = vld [vmem:[%s239] sm:$0xff]
        %v342 = vstv %s340
        %v343 = vmul.f32 %v342, %v341
        %v344 = vadd.f32 %v339, %v343
        %v346 = vsel %vm244, %v344, 0
        %348 = vmatprep.subr.mxu0 0.0
        %349 = vmatpush1.msra.mxu0 %v220
        %350 = vmatprep.subr.mxu0 0.0
        %351 = vmatpush1.msra.mxu0 %v221
        %352 = vmatprep.subr.mxu0 0.0
        %353 = vmatpush1.msra.mxu0 0.0
        %354 = vmatprep.subr.mxu0 0.0
        %355 = vmatpush1.msra.mxu0 0.0
        %356 = vmatprep.subr.mxu0 0.0
        %357 = vmatpush1.msra.mxu0 0.0
        %358 = vmatprep.subr.mxu0 0.0
        %359 = vmatpush1.msra.mxu0 0.0
        %360 = vmatprep.subr.mxu0 0.0
        %361 = vmatpush1.msra.mxu0 0.0
        %362 = vmatprep.subr.mxu0 0.0
        %363 = vmatpush1.msra.mxu0 0.0
        %364 = vmatprep.subr.mxu0 0.0
        %365 = vmatpush1.msra.mxu0 0.0
        %366 = vmatprep.subr.mxu0 0.0
        %367 = vmatpush1.msra.mxu0 0.0
        %368 = vmatprep.subr.mxu0 0.0
        %369 = vmatpush1.msra.mxu0 0.0
        %370 = vmatprep.subr.mxu0 0.0
        %371 = vmatpush1.msra.mxu0 0.0
        %372 = vmatprep.subr.mxu0 0.0
        %373 = vmatpush1.msra.mxu0 0.0
        %374 = vmatprep.subr.mxu0 0.0
        %375 = vmatpush1.msra.mxu0 0.0
        %376 = vmatprep.subr.mxu0 0.0
        %377 = vmatpush1.msra.mxu0 0.0
        %378 = vmatprep.subr.mxu0 0.0
        %379 = vmatpush1.msra.mxu0 0.0
        %380 = vmatprep.subr.mxu0 0.0
        %381 = vmatpush1.msra.mxu0 0.0
        %382 = vmatprep.subr.mxu0 0.0
        %383 = vmatpush1.msra.mxu0 0.0
        %384 = vmatprep.subr.mxu0 0.0
        %385 = vmatpush1.msra.mxu0 0.0
        %386 = vmatprep.subr.mxu0 0.0
        %387 = vmatpush1.msra.mxu0 0.0
        %388 = vmatprep.subr.mxu0 0.0
        %389 = vmatpush1.msra.mxu0 0.0
        %390 = vmatprep.subr.mxu0 0.0
        %391 = vmatpush1.msra.mxu0 0.0
        %392 = vmatprep.subr.mxu0 0.0
        %393 = vmatpush1.msra.mxu0 0.0
        %394 = vmatprep.subr.mxu0 0.0
        %395 = vmatpush1.msra.mxu0 0.0
        %396 = vmatprep.subr.mxu0 0.0
        %397 = vmatpush1.msra.mxu0 0.0
        %398 = vmatprep.subr.mxu0 0.0
        %399 = vmatpush1.msra.mxu0 0.0
        %400 = vmatprep.subr.mxu0 0.0
        %401 = vmatpush1.msra.mxu0 0.0
        %402 = vmatprep.subr.mxu0 0.0
        %403 = vmatpush1.msra.mxu0 0.0
        %404 = vmatprep.subr.mxu0 0.0
        %405 = vmatpush1.msra.mxu0 0.0
        %406 = vmatprep.subr.mxu0 0.0
        %407 = vmatpush1.msra.mxu0 0.0
        %408 = vmatprep.subr.mxu0 0.0
        %409 = vmatpush1.msra.mxu0 0.0
        %410 = vmatprep.subr.mxu0 0.0
        %411 = vmatpush1.msra.mxu0 0.0
        %412 = vmatprep.mubr.f32.mxu0 0.0
        %413 = vmatmul.mubr.f32.gmra.mrb[0].mxu0 %v346
        %v414 = vpop.f32.mrb[0].mxu0
        %v415 = vadd.f32 0.0, %v414
        %v416 = vpop.f32.mrb[0].mxu0
        %417 = vdwg.mxu0
        %s418 = scalar_lea.vmem %s219, 8 [#allocation7]
        %419 = vst.msk [vmem:[%s418] sm:$0xff] %vm318, %v415
        %421 = vrot.lane.b32.xlu0 %v415, 32
        %v422 = vpop.permute.xlu0 %421
        %424 = vst.msk [vmem:[%s418] sm:$0xff] %vm324, %v422
        %s425 = sld [smem:[#allocation6 + $0x100]]
        %v426 = vld [vmem:[%s192] sm:$0xff]
        %v427 = vstv %s425
        %v428 = vmul.f32 %v427, %v426
        %s429 = sld [smem:[#allocation6 + $0x101]]
        %v430 = vld [vmem:[%s227] sm:$0xff]
        %v431 = vstv %s429
        %v432 = vmul.f32 %v431, %v430
        %v433 = vadd.f32 %v428, %v432
        %s434 = sld [smem:[#allocation6 + $0x102]]
        %v435 = vld [vmem:[%s233] sm:$0xff]
        %v436 = vstv %s434
        %v437 = vmul.f32 %v436, %v435
        %v438 = vadd.f32 %v433, %v437
        %s439 = sld [smem:[#allocation6 + $0x103]]
        %v440 = vld [vmem:[%s239] sm:$0xff]
        %v441 = vstv %s439
        %v442 = vmul.f32 %v441, %v440
        %v443 = vadd.f32 %v438, %v442
        %v445 = vsel %vm244, %v443, 0
        %447 = vmatprep.subr.mxu0 0.0
        %448 = vmatpush1.msra.mxu0 %v220
        %449 = vmatprep.subr.mxu0 0.0
        %450 = vmatpush1.msra.mxu0 %v221
        %451 = vmatprep.subr.mxu0 0.0
        %452 = vmatpush1.msra.mxu0 0.0
        %453 = vmatprep.subr.mxu0 0.0
        %454 = vmatpush1.msra.mxu0 0.0
        %455 = vmatprep.subr.mxu0 0.0
        %456 = vmatpush1.msra.mxu0 0.0
        %457 = vmatprep.subr.mxu0 0.0
        %458 = vmatpush1.msra.mxu0 0.0
        %459 = vmatprep.subr.mxu0 0.0
        %460 = vmatpush1.msra.mxu0 0.0
        %461 = vmatprep.subr.mxu0 0.0
        %462 = vmatpush1.msra.mxu0 0.0
        %463 = vmatprep.subr.mxu0 0.0
        %464 = vmatpush1.msra.mxu0 0.0
        %465 = vmatprep.subr.mxu0 0.0
        %466 = vmatpush1.msra.mxu0 0.0
        %467 = vmatprep.subr.mxu0 0.0
        %468 = vmatpush1.msra.mxu0 0.0
        %469 = vmatprep.subr.mxu0 0.0
        %470 = vmatpush1.msra.mxu0 0.0
        %471 = vmatprep.subr.mxu0 0.0
        %472 = vmatpush1.msra.mxu0 0.0
        %473 = vmatprep.subr.mxu0 0.0
        %474 = vmatpush1.msra.mxu0 0.0
        %475 = vmatprep.subr.mxu0 0.0
        %476 = vmatpush1.msra.mxu0 0.0
        %477 = vmatprep.subr.mxu0 0.0
        %478 = vmatpush1.msra.mxu0 0.0
        %479 = vmatprep.subr.mxu0 0.0
        %480 = vmatpush1.msra.mxu0 0.0
        %481 = vmatprep.subr.mxu0 0.0
        %482 = vmatpush1.msra.mxu0 0.0
        %483 = vmatprep.subr.mxu0 0.0
        %484 = vmatpush1.msra.mxu0 0.0
        %485 = vmatprep.subr.mxu0 0.0
        %486 = vmatpush1.msra.mxu0 0.0
        %487 = vmatprep.subr.mxu0 0.0
        %488 = vmatpush1.msra.mxu0 0.0
        %489 = vmatprep.subr.mxu0 0.0
        %490 = vmatpush1.msra.mxu0 0.0
        %491 = vmatprep.subr.mxu0 0.0
        %492 = vmatpush1.msra.mxu0 0.0
        %493 = vmatprep.subr.mxu0 0.0
        %494 = vmatpush1.msra.mxu0 0.0
        %495 = vmatprep.subr.mxu0 0.0
        %496 = vmatpush1.msra.mxu0 0.0
        %497 = vmatprep.subr.mxu0 0.0
        %498 = vmatpush1.msra.mxu0 0.0
        %499 = vmatprep.subr.mxu0 0.0
        %500 = vmatpush1.msra.mxu0 0.0
        %501 = vmatprep.subr.mxu0 0.0
        %502 = vmatpush1.msra.mxu0 0.0
        %503 = vmatprep.subr.mxu0 0.0
        %504 = vmatpush1.msra.mxu0 0.0
        %505 = vmatprep.subr.mxu0 0.0
        %506 = vmatpush1.msra.mxu0 0.0
        %507 = vmatprep.subr.mxu0 0.0
        %508 = vmatpush1.msra.mxu0 0.0
        %509 = vmatprep.subr.mxu0 0.0
        %510 = vmatpush1.msra.mxu0 0.0
        %511 = vmatprep.mubr.f32.mxu0 0.0
        %512 = vmatmul.mubr.f32.gmra.mrb[0].mxu0 %v445
        %v513 = vpop.f32.mrb[0].mxu0
        %v514 = vadd.f32 0.0, %v513
        %v515 = vpop.f32.mrb[0].mxu0
        %516 = vdwg.mxu0
        %s517 = scalar_lea.vmem %s219, 16 [#allocation7]
        %518 = vst.msk [vmem:[%s517] sm:$0xff] %vm318, %v514
        %520 = vrot.lane.b32.xlu0 %v514, 32
        %v521 = vpop.permute.xlu0 %520
        %523 = vst.msk [vmem:[%s517] sm:$0xff] %vm324, %v521
        %s524 = sld [smem:[#allocation6 + $0x180]]
        %v525 = vld [vmem:[%s192] sm:$0xff]
        %v526 = vstv %s524
        %v527 = vmul.f32 %v526, %v525
        %s528 = sld [smem:[#allocation6 + $0x181]]
        %v529 = vld [vmem:[%s227] sm:$0xff]
        %v530 = vstv %s528
        %v531 = vmul.f32 %v530, %v529
        %v532 = vadd.f32 %v527, %v531
        %s533 = sld [smem:[#allocation6 + $0x182]]
        %v534 = vld [vmem:[%s233] sm:$0xff]
        %v535 = vstv %s533
        %v536 = vmul.f32 %v535, %v534
        %v537 = vadd.f32 %v532, %v536
        %s538 = sld [smem:[#allocation6 + $0x183]]
        %v539 = vld [vmem:[%s239] sm:$0xff]
        %v540 = vstv %s538
        %v541 = vmul.f32 %v540, %v539
        %v542 = vadd.f32 %v537, %v541
        %v544 = vsel %vm244, %v542, 0
        %546 = vmatprep.subr.mxu0 0.0
        %547 = vmatpush1.msra.mxu0 %v220
        %548 = vmatprep.subr.mxu0 0.0
        %549 = vmatpush1.msra.mxu0 %v221
        %550 = vmatprep.subr.mxu0 0.0
        %551 = vmatpush1.msra.mxu0 0.0
        %552 = vmatprep.subr.mxu0 0.0
        %553 = vmatpush1.msra.mxu0 0.0
        %554 = vmatprep.subr.mxu0 0.0
        %555 = vmatpush1.msra.mxu0 0.0
        %556 = vmatprep.subr.mxu0 0.0
        %557 = vmatpush1.msra.mxu0 0.0
        %558 = vmatprep.subr.mxu0 0.0
        %559 = vmatpush1.msra.mxu0 0.0
        %560 = vmatprep.subr.mxu0 0.0
        %561 = vmatpush1.msra.mxu0 0.0
        %562 = vmatprep.subr.mxu0 0.0
        %563 = vmatpush1.msra.mxu0 0.0
        %564 = vmatprep.subr.mxu0 0.0
        %565 = vmatpush1.msra.mxu0 0.0
        %566 = vmatprep.subr.mxu0 0.0
        %567 = vmatpush1.msra.mxu0 0.0
        %568 = vmatprep.subr.mxu0 0.0
        %569 = vmatpush1.msra.mxu0 0.0
        %570 = vmatprep.subr.mxu0 0.0
        %571 = vmatpush1.msra.mxu0 0.0
        %572 = vmatprep.subr.mxu0 0.0
        %573 = vmatpush1.msra.mxu0 0.0
        %574 = vmatprep.subr.mxu0 0.0
        %575 = vmatpush1.msra.mxu0 0.0
        %576 = vmatprep.subr.mxu0 0.0
        %577 = vmatpush1.msra.mxu0 0.0
        %578 = vmatprep.subr.mxu0 0.0
        %579 = vmatpush1.msra.mxu0 0.0
        %580 = vmatprep.subr.mxu0 0.0
        %581 = vmatpush1.msra.mxu0 0.0
        %582 = vmatprep.subr.mxu0 0.0
        %583 = vmatpush1.msra.mxu0 0.0
        %584 = vmatprep.subr.mxu0 0.0
        %585 = vmatpush1.msra.mxu0 0.0
        %586 = vmatprep.subr.mxu0 0.0
        %587 = vmatpush1.msra.mxu0 0.0
        %588 = vmatprep.subr.mxu0 0.0
        %589 = vmatpush1.msra.mxu0 0.0
        %590 = vmatprep.subr.mxu0 0.0
        %591 = vmatpush1.msra.mxu0 0.0
        %592 = vmatprep.subr.mxu0 0.0
        %593 = vmatpush1.msra.mxu0 0.0
        %594 = vmatprep.subr.mxu0 0.0
        %595 = vmatpush1.msra.mxu0 0.0
        %596 = vmatprep.subr.mxu0 0.0
        %597 = vmatpush1.msra.mxu0 0.0
        %598 = vmatprep.subr.mxu0 0.0
        %599 = vmatpush1.msra.mxu0 0.0
        %600 = vmatprep.subr.mxu0 0.0
        %601 = vmatpush1.msra.mxu0 0.0
        %602 = vmatprep.subr.mxu0 0.0
        %603 = vmatpush1.msra.mxu0 0.0
        %604 = vmatprep.subr.mxu0 0.0
        %605 = vmatpush1.msra.mxu0 0.0
        %606 = vmatprep.subr.mxu0 0.0
        %607 = vmatpush1.msra.mxu0 0.0
        %608 = vmatprep.subr.mxu0 0.0
        %609 = vmatpush1.msra.mxu0 0.0
        %610 = vmatprep.mubr.f32.mxu0 0.0
        %611 = vmatmul.mubr.f32.gmra.mrb[0].mxu0 %v544
        %v612 = vpop.f32.mrb[0].mxu0
        %v613 = vadd.f32 0.0, %v612
        %v614 = vpop.f32.mrb[0].mxu0
        %615 = vdwg.mxu0
        %s616 = scalar_lea.vmem %s219, 24 [#allocation7]
        %617 = vst.msk [vmem:[%s616] sm:$0xff] %vm318, %v613
        %619 = vrot.lane.b32.xlu0 %v613, 32
        %v620 = vpop.permute.xlu0 %619
        %622 = vst.msk [vmem:[%s616] sm:$0xff] %vm324, %v620
        %s623 = sld [smem:[#allocation6 + $0x200]]
        %v624 = vld [vmem:[%s192] sm:$0xff]
        %v625 = vstv %s623
        %v626 = vmul.f32 %v625, %v624
        %s627 = sld [smem:[#allocation6 + $0x201]]
        %v628 = vld [vmem:[%s227] sm:$0xff]
        %v629 = vstv %s627
        %v630 = vmul.f32 %v629, %v628
        %v631 = vadd.f32 %v626, %v630
        %s632 = sld [smem:[#allocation6 + $0x202]]
        %v633 = vld [vmem:[%s233] sm:$0xff]
        %v634 = vstv %s632
        %v635 = vmul.f32 %v634, %v633
        %v636 = vadd.f32 %v631, %v635
        %s637 = sld [smem:[#allocation6 + $0x203]]
        %v638 = vld [vmem:[%s239] sm:$0xff]
        %v639 = vstv %s637
        %v640 = vmul.f32 %v639, %v638
        %v641 = vadd.f32 %v636, %v640
        %v643 = vsel %vm244, %v641, 0
        %645 = vmatprep.subr.mxu0 0.0
        %646 = vmatpush1.msra.mxu0 %v220
        %647 = vmatprep.subr.mxu0 0.0
        %648 = vmatpush1.msra.mxu0 %v221
        %649 = vmatprep.subr.mxu0 0.0
        %650 = vmatpush1.msra.mxu0 0.0
        %651 = vmatprep.subr.mxu0 0.0
        %652 = vmatpush1.msra.mxu0 0.0
        %653 = vmatprep.subr.mxu0 0.0
        %654 = vmatpush1.msra.mxu0 0.0
        %655 = vmatprep.subr.mxu0 0.0
        %656 = vmatpush1.msra.mxu0 0.0
        %657 = vmatprep.subr.mxu0 0.0
        %658 = vmatpush1.msra.mxu0 0.0
        %659 = vmatprep.subr.mxu0 0.0
        %660 = vmatpush1.msra.mxu0 0.0
        %661 = vmatprep.subr.mxu0 0.0
        %662 = vmatpush1.msra.mxu0 0.0
        %663 = vmatprep.subr.mxu0 0.0
        %664 = vmatpush1.msra.mxu0 0.0
        %665 = vmatprep.subr.mxu0 0.0
        %666 = vmatpush1.msra.mxu0 0.0
        %667 = vmatprep.subr.mxu0 0.0
        %668 = vmatpush1.msra.mxu0 0.0
        %669 = vmatprep.subr.mxu0 0.0
        %670 = vmatpush1.msra.mxu0 0.0
        %671 = vmatprep.subr.mxu0 0.0
        %672 = vmatpush1.msra.mxu0 0.0
        %673 = vmatprep.subr.mxu0 0.0
        %674 = vmatpush1.msra.mxu0 0.0
        %675 = vmatprep.subr.mxu0 0.0
        %676 = vmatpush1.msra.mxu0 0.0
        %677 = vmatprep.subr.mxu0 0.0
        %678 = vmatpush1.msra.mxu0 0.0
        %679 = vmatprep.subr.mxu0 0.0
        %680 = vmatpush1.msra.mxu0 0.0
        %681 = vmatprep.subr.mxu0 0.0
        %682 = vmatpush1.msra.mxu0 0.0
        %683 = vmatprep.subr.mxu0 0.0
        %684 = vmatpush1.msra.mxu0 0.0
        %685 = vmatprep.subr.mxu0 0.0
        %686 = vmatpush1.msra.mxu0 0.0
        %687 = vmatprep.subr.mxu0 0.0
        %688 = vmatpush1.msra.mxu0 0.0
        %689 = vmatprep.subr.mxu0 0.0
        %690 = vmatpush1.msra.mxu0 0.0
        %691 = vmatprep.subr.mxu0 0.0
        %692 = vmatpush1.msra.mxu0 0.0
        %693 = vmatprep.subr.mxu0 0.0
        %694 = vmatpush1.msra.mxu0 0.0
        %695 = vmatprep.subr.mxu0 0.0
        %696 = vmatpush1.msra.mxu0 0.0
        %697 = vmatprep.subr.mxu0 0.0
        %698 = vmatpush1.msra.mxu0 0.0
        %699 = vmatprep.subr.mxu0 0.0
        %700 = vmatpush1.msra.mxu0 0.0
        %701 = vmatprep.subr.mxu0 0.0
        %702 = vmatpush1.msra.mxu0 0.0
        %703 = vmatprep.subr.mxu0 0.0
        %704 = vmatpush1.msra.mxu0 0.0
        %705 = vmatprep.subr.mxu0 0.0
        %706 = vmatpush1.msra.mxu0 0.0
        %707 = vmatprep.subr.mxu0 0.0
        %708 = vmatpush1.msra.mxu0 0.0
        %709 = vmatprep.mubr.f32.mxu0 0.0
        %710 = vmatmul.mubr.f32.gmra.mrb[0].mxu0 %v643
        %v711 = vpop.f32.mrb[0].mxu0
        %v712 = vadd.f32 0.0, %v711
        %v713 = vpop.f32.mrb[0].mxu0
        %714 = vdwg.mxu0
        %s715 = scalar_lea.vmem %s219, 32 [#allocation7]
        %716 = vst.msk [vmem:[%s715] sm:$0xff] %vm318, %v712
        %718 = vrot.lane.b32.xlu0 %v712, 32
        %v719 = vpop.permute.xlu0 %718
        %721 = vst.msk [vmem:[%s715] sm:$0xff] %vm324, %v719
        %s722 = sld [smem:[#allocation6 + $0x280]]
        %v723 = vld [vmem:[%s192] sm:$0xff]
        %v724 = vstv %s722
        %v725 = vmul.f32 %v724, %v723
        %s726 = sld [smem:[#allocation6 + $0x281]]
        %v727 = vld [vmem:[%s227] sm:$0xff]
        %v728 = vstv %s726
        %v729 = vmul.f32 %v728, %v727
        %v730 = vadd.f32 %v725, %v729
        %s731 = sld [smem:[#allocation6 + $0x282]]
        %v732 = vld [vmem:[%s233] sm:$0xff]
        %v733 = vstv %s731
        %v734 = vmul.f32 %v733, %v732
        %v735 = vadd.f32 %v730, %v734
        %s736 = sld [smem:[#allocation6 + $0x283]]
        %v737 = vld [vmem:[%s239] sm:$0xff]
        %v738 = vstv %s736
        %v739 = vmul.f32 %v738, %v737
        %v740 = vadd.f32 %v735, %v739
        %v742 = vsel %vm244, %v740, 0
        %744 = vmatprep.subr.mxu0 0.0
        %745 = vmatpush1.msra.mxu0 %v220
        %746 = vmatprep.subr.mxu0 0.0
        %747 = vmatpush1.msra.mxu0 %v221
        %748 = vmatprep.subr.mxu0 0.0
        %749 = vmatpush1.msra.mxu0 0.0
        %750 = vmatprep.subr.mxu0 0.0
        %751 = vmatpush1.msra.mxu0 0.0
        %752 = vmatprep.subr.mxu0 0.0
        %753 = vmatpush1.msra.mxu0 0.0
        %754 = vmatprep.subr.mxu0 0.0
        %755 = vmatpush1.msra.mxu0 0.0
        %756 = vmatprep.subr.mxu0 0.0
        %757 = vmatpush1.msra.mxu0 0.0
        %758 = vmatprep.subr.mxu0 0.0
        %759 = vmatpush1.msra.mxu0 0.0
        %760 = vmatprep.subr.mxu0 0.0
        %761 = vmatpush1.msra.mxu0 0.0
        %762 = vmatprep.subr.mxu0 0.0
        %763 = vmatpush1.msra.mxu0 0.0
        %764 = vmatprep.subr.mxu0 0.0
        %765 = vmatpush1.msra.mxu0 0.0
        %766 = vmatprep.subr.mxu0 0.0
        %767 = vmatpush1.msra.mxu0 0.0
        %768 = vmatprep.subr.mxu0 0.0
        %769 = vmatpush1.msra.mxu0 0.0
        %770 = vmatprep.subr.mxu0 0.0
        %771 = vmatpush1.msra.mxu0 0.0
        %772 = vmatprep.subr.mxu0 0.0
        %773 = vmatpush1.msra.mxu0 0.0
        %774 = vmatprep.subr.mxu0 0.0
        %775 = vmatpush1.msra.mxu0 0.0
        %776 = vmatprep.subr.mxu0 0.0
        %777 = vmatpush1.msra.mxu0 0.0
        %778 = vmatprep.subr.mxu0 0.0
        %779 = vmatpush1.msra.mxu0 0.0
        %780 = vmatprep.subr.mxu0 0.0
        %781 = vmatpush1.msra.mxu0 0.0
        %782 = vmatprep.subr.mxu0 0.0
        %783 = vmatpush1.msra.mxu0 0.0
        %784 = vmatprep.subr.mxu0 0.0
        %785 = vmatpush1.msra.mxu0 0.0
        %786 = vmatprep.subr.mxu0 0.0
        %787 = vmatpush1.msra.mxu0 0.0
        %788 = vmatprep.subr.mxu0 0.0
        %789 = vmatpush1.msra.mxu0 0.0
        %790 = vmatprep.subr.mxu0 0.0
        %791 = vmatpush1.msra.mxu0 0.0
        %792 = vmatprep.subr.mxu0 0.0
        %793 = vmatpush1.msra.mxu0 0.0
        %794 = vmatprep.subr.mxu0 0.0
        %795 = vmatpush1.msra.mxu0 0.0
        %796 = vmatprep.subr.mxu0 0.0
        %797 = vmatpush1.msra.mxu0 0.0
        %798 = vmatprep.subr.mxu0 0.0
        %799 = vmatpush1.msra.mxu0 0.0
        %800 = vmatprep.subr.mxu0 0.0
        %801 = vmatpush1.msra.mxu0 0.0
        %802 = vmatprep.subr.mxu0 0.0
        %803 = vmatpush1.msra.mxu0 0.0
        %804 = vmatprep.subr.mxu0 0.0
        %805 = vmatpush1.msra.mxu0 0.0
        %806 = vmatprep.subr.mxu0 0.0
        %807 = vmatpush1.msra.mxu0 0.0
        %808 = vmatprep.mubr.f32.mxu0 0.0
        %809 = vmatmul.mubr.f32.gmra.mrb[0].mxu0 %v742
        %v810 = vpop.f32.mrb[0].mxu0
        %v811 = vadd.f32 0.0, %v810
        %v812 = vpop.f32.mrb[0].mxu0
        %813 = vdwg.mxu0
        %s814 = scalar_lea.vmem %s219, 40 [#allocation7]
        %815 = vst.msk [vmem:[%s814] sm:$0xff] %vm318, %v811
        %817 = vrot.lane.b32.xlu0 %v811, 32
        %v818 = vpop.permute.xlu0 %817
        %820 = vst.msk [vmem:[%s814] sm:$0xff] %vm324, %v818
        %s821 = sld [smem:[#allocation6 + $0x300]]
        %v822 = vld [vmem:[%s192] sm:$0xff]
        %v823 = vstv %s821
        %v824 = vmul.f32 %v823, %v822
        %s825 = sld [smem:[#allocation6 + $0x301]]
        %v826 = vld [vmem:[%s227] sm:$0xff]
        %v827 = vstv %s825
        %v828 = vmul.f32 %v827, %v826
        %v829 = vadd.f32 %v824, %v828
        %s830 = sld [smem:[#allocation6 + $0x302]]
        %v831 = vld [vmem:[%s233] sm:$0xff]
        %v832 = vstv %s830
        %v833 = vmul.f32 %v832, %v831
        %v834 = vadd.f32 %v829, %v833
        %s835 = sld [smem:[#allocation6 + $0x303]]
        %v836 = vld [vmem:[%s239] sm:$0xff]
        %v837 = vstv %s835
        %v838 = vmul.f32 %v837, %v836
        %v839 = vadd.f32 %v834, %v838
        %v841 = vsel %vm244, %v839, 0
        %843 = vmatprep.subr.mxu0 0.0
        %844 = vmatpush1.msra.mxu0 %v220
        %845 = vmatprep.subr.mxu0 0.0
        %846 = vmatpush1.msra.mxu0 %v221
        %847 = vmatprep.subr.mxu0 0.0
        %848 = vmatpush1.msra.mxu0 0.0
        %849 = vmatprep.subr.mxu0 0.0
        %850 = vmatpush1.msra.mxu0 0.0
        %851 = vmatprep.subr.mxu0 0.0
        %852 = vmatpush1.msra.mxu0 0.0
        %853 = vmatprep.subr.mxu0 0.0
        %854 = vmatpush1.msra.mxu0 0.0
        %855 = vmatprep.subr.mxu0 0.0
        %856 = vmatpush1.msra.mxu0 0.0
        %857 = vmatprep.subr.mxu0 0.0
        %858 = vmatpush1.msra.mxu0 0.0
        %859 = vmatprep.subr.mxu0 0.0
        %860 = vmatpush1.msra.mxu0 0.0
        %861 = vmatprep.subr.mxu0 0.0
        %862 = vmatpush1.msra.mxu0 0.0
        %863 = vmatprep.subr.mxu0 0.0
        %864 = vmatpush1.msra.mxu0 0.0
        %865 = vmatprep.subr.mxu0 0.0
        %866 = vmatpush1.msra.mxu0 0.0
        %867 = vmatprep.subr.mxu0 0.0
        %868 = vmatpush1.msra.mxu0 0.0
        %869 = vmatprep.subr.mxu0 0.0
        %870 = vmatpush1.msra.mxu0 0.0
        %871 = vmatprep.subr.mxu0 0.0
        %872 = vmatpush1.msra.mxu0 0.0
        %873 = vmatprep.subr.mxu0 0.0
        %874 = vmatpush1.msra.mxu0 0.0
        %875 = vmatprep.subr.mxu0 0.0
        %876 = vmatpush1.msra.mxu0 0.0
        %877 = vmatprep.subr.mxu0 0.0
        %878 = vmatpush1.msra.mxu0 0.0
        %879 = vmatprep.subr.mxu0 0.0
        %880 = vmatpush1.msra.mxu0 0.0
        %881 = vmatprep.subr.mxu0 0.0
        %882 = vmatpush1.msra.mxu0 0.0
        %883 = vmatprep.subr.mxu0 0.0
        %884 = vmatpush1.msra.mxu0 0.0
        %885 = vmatprep.subr.mxu0 0.0
        %886 = vmatpush1.msra.mxu0 0.0
        %887 = vmatprep.subr.mxu0 0.0
        %888 = vmatpush1.msra.mxu0 0.0
        %889 = vmatprep.subr.mxu0 0.0
        %890 = vmatpush1.msra.mxu0 0.0
        %891 = vmatprep.subr.mxu0 0.0
        %892 = vmatpush1.msra.mxu0 0.0
        %893 = vmatprep.subr.mxu0 0.0
        %894 = vmatpush1.msra.mxu0 0.0
        %895 = vmatprep.subr.mxu0 0.0
        %896 = vmatpush1.msra.mxu0 0.0
        %897 = vmatprep.subr.mxu0 0.0
        %898 = vmatpush1.msra.mxu0 0.0
        %899 = vmatprep.subr.mxu0 0.0
        %900 = vmatpush1.msra.mxu0 0.0
        %901 = vmatprep.subr.mxu0 0.0
        %902 = vmatpush1.msra.mxu0 0.0
        %903 = vmatprep.subr.mxu0 0.0
        %904 = vmatpush1.msra.mxu0 0.0
        %905 = vmatprep.subr.mxu0 0.0
        %906 = vmatpush1.msra.mxu0 0.0
        %907 = vmatprep.mubr.f32.mxu0 0.0
        %908 = vmatmul.mubr.f32.gmra.mrb[0].mxu0 %v841
        %v909 = vpop.f32.mrb[0].mxu0
        %v910 = vadd.f32 0.0, %v909
        %v911 = vpop.f32.mrb[0].mxu0
        %912 = vdwg.mxu0
        %s913 = scalar_lea.vmem %s219, 48 [#allocation7]
        %914 = vst.msk [vmem:[%s913] sm:$0xff] %vm318, %v910
        %916 = vrot.lane.b32.xlu0 %v910, 32
        %v917 = vpop.permute.xlu0 %916
        %919 = vst.msk [vmem:[%s913] sm:$0xff] %vm324, %v917
        %s920 = sld [smem:[#allocation6 + $0x380]]
        %v921 = vld [vmem:[%s192] sm:$0xff]
        %v922 = vstv %s920
        %v923 = vmul.f32 %v922, %v921
        %s924 = sld [smem:[#allocation6 + $0x381]]
        %v925 = vld [vmem:[%s227] sm:$0xff]
        %v926 = vstv %s924
        %v927 = vmul.f32 %v926, %v925
        %v928 = vadd.f32 %v923, %v927
        %s929 = sld [smem:[#allocation6 + $0x382]]
        %v930 = vld [vmem:[%s233] sm:$0xff]
        %v931 = vstv %s929
        %v932 = vmul.f32 %v931, %v930
        %v933 = vadd.f32 %v928, %v932
        %s934 = sld [smem:[#allocation6 + $0x383]]
        %v935 = vld [vmem:[%s239] sm:$0xff]
        %v936 = vstv %s934
        %v937 = vmul.f32 %v936, %v935
        %v938 = vadd.f32 %v933, %v937
        %v940 = vsel %vm244, %v938, 0
        %942 = vmatprep.subr.mxu0 0.0
        %943 = vmatpush1.msra.mxu0 %v220
        %944 = vmatprep.subr.mxu0 0.0
        %945 = vmatpush1.msra.mxu0 %v221
        %946 = vmatprep.subr.mxu0 0.0
        %947 = vmatpush1.msra.mxu0 0.0
        %948 = vmatprep.subr.mxu0 0.0
        %949 = vmatpush1.msra.mxu0 0.0
        %950 = vmatprep.subr.mxu0 0.0
        %951 = vmatpush1.msra.mxu0 0.0
        %952 = vmatprep.subr.mxu0 0.0
        %953 = vmatpush1.msra.mxu0 0.0
        %954 = vmatprep.subr.mxu0 0.0
        %955 = vmatpush1.msra.mxu0 0.0
        %956 = vmatprep.subr.mxu0 0.0
        %957 = vmatpush1.msra.mxu0 0.0
        %958 = vmatprep.subr.mxu0 0.0
        %959 = vmatpush1.msra.mxu0 0.0
        %960 = vmatprep.subr.mxu0 0.0
        %961 = vmatpush1.msra.mxu0 0.0
        %962 = vmatprep.subr.mxu0 0.0
        %963 = vmatpush1.msra.mxu0 0.0
        %964 = vmatprep.subr.mxu0 0.0
        %965 = vmatpush1.msra.mxu0 0.0
        %966 = vmatprep.subr.mxu0 0.0
        %967 = vmatpush1.msra.mxu0 0.0
        %968 = vmatprep.subr.mxu0 0.0
        %969 = vmatpush1.msra.mxu0 0.0
        %970 = vmatprep.subr.mxu0 0.0
        %971 = vmatpush1.msra.mxu0 0.0
        %972 = vmatprep.subr.mxu0 0.0
        %973 = vmatpush1.msra.mxu0 0.0
        %974 = vmatprep.subr.mxu0 0.0
        %975 = vmatpush1.msra.mxu0 0.0
        %976 = vmatprep.subr.mxu0 0.0
        %977 = vmatpush1.msra.mxu0 0.0
        %978 = vmatprep.subr.mxu0 0.0
        %979 = vmatpush1.msra.mxu0 0.0
        %980 = vmatprep.subr.mxu0 0.0
        %981 = vmatpush1.msra.mxu0 0.0
        %982 = vmatprep.subr.mxu0 0.0
        %983 = vmatpush1.msra.mxu0 0.0
        %984 = vmatprep.subr.mxu0 0.0
        %985 = vmatpush1.msra.mxu0 0.0
        %986 = vmatprep.subr.mxu0 0.0
        %987 = vmatpush1.msra.mxu0 0.0
        %988 = vmatprep.subr.mxu0 0.0
        %989 = vmatpush1.msra.mxu0 0.0
        %990 = vmatprep.subr.mxu0 0.0
        %991 = vmatpush1.msra.mxu0 0.0
        %992 = vmatprep.subr.mxu0 0.0
        %993 = vmatpush1.msra.mxu0 0.0
        %994 = vmatprep.subr.mxu0 0.0
        %995 = vmatpush1.msra.mxu0 0.0
        %996 = vmatprep.subr.mxu0 0.0
        %997 = vmatpush1.msra.mxu0 0.0
        %998 = vmatprep.subr.mxu0 0.0
        %999 = vmatpush1.msra.mxu0 0.0
        %1000 = vmatprep.subr.mxu0 0.0
        %1001 = vmatpush1.msra.mxu0 0.0
        %1002 = vmatprep.subr.mxu0 0.0
        %1003 = vmatpush1.msra.mxu0 0.0
        %1004 = vmatprep.subr.mxu0 0.0
        %1005 = vmatpush1.msra.mxu0 0.0
        %1006 = vmatprep.mubr.f32.mxu0 0.0
        %1007 = vmatmul.mubr.f32.gmra.mrb[0].mxu0 %v940
        %v1008 = vpop.f32.mrb[0].mxu0
        %v1009 = vadd.f32 0.0, %v1008
        %v1010 = vpop.f32.mrb[0].mxu0
        %1011 = vdwg.mxu0
        %s1012 = scalar_lea.vmem %s219, 56 [#allocation7]
        %1013 = vst.msk [vmem:[%s1012] sm:$0xff] %vm318, %v1009
        %1015 = vrot.lane.b32.xlu0 %v1009, 32
        %v1016 = vpop.permute.xlu0 %1015
        %1018 = vst.msk [vmem:[%s1012] sm:$0xff] %vm324, %v1016
        %s1019 = sand.u32 %s113, 1
        %s1020 = scalar_lea.sflag [#allocation4], %s1019
        %s1021 = sand.u32 %s113, 1
        %s1022 = smul.addr %s1021, 64
        %s1023 = scalar_lea.vmem [#allocation7], %s1022
        // Predicated region
        $region41: #{tpu_custom_call.1} parent=31 // pred_check
          %p1024 = pneg %p123
        $region42: #{tpu_custom_call.1} parent=31 // pred_check_branch
          %1026 = sbr.rel (%p1024) target = $region44
        $region43: #{tpu_custom_call.1} parent=31 // pred_region
          %s1028 = ssub.s32 1024, 1024
          %1029 = vsyncadd %s1020, %s1028
          %s1030 = smul.addr %s25, 16
          %s1031 = sadd.s32 %s26, %s1030
          %s1032 = smul.addr %s1031, 128
          %s1033 = scalar_lea.hbm %s3, %s1032
          %s1034 = sshll.u32 %s1023, 4
          %s1035 = int_to_ptr.vmem [resolvable:$true] %s1034
          %1040 = dma.vmem_to_hbm [thread:$0]  %s1035, 1024, %s1033, %s1020, 128, 256, 8
        $region44: #{tpu_custom_call.1} parent=31 // pred_fallthru
          _
      $region32: #{tpu_custom_call.1} parent=5 // pred_fallthru
        _
      %p1041 = scmp.le.s32.totalorder 2, %s16
      // Predicated region
      $region45: #{tpu_custom_call.1} parent=5 // pred_check
        %p1042 = pneg %p1041
      $region46: #{tpu_custom_call.1} parent=5 // pred_check_branch
        %1044 = sbr.rel (%p1042) target = $region48
      $region47: #{tpu_custom_call.1} parent=5 // pred_region
        %s1045 = ssub.s32 %s16, 2
        // Predicated region
        $region49: #{tpu_custom_call.1} parent=47 // pred_check
          %p1046 = pneg %p129
        $region50: #{tpu_custom_call.1} parent=47 // pred_check_branch
          %1048 = sbr.rel (%p1046) target = $region52
        $region51: #{tpu_custom_call.1} parent=47 // pred_region
          %s1049 = sand.u32 %s114, 1
          %s1050 = scalar_lea.sflag [#allocation4], %s1049
          %s1051 = sand.u32 %s114, 1
          %s1052 = smul.addr %s1051, 64
          %s1053 = scalar_lea.vmem [#allocation7], %s1052
          %1054 = dma.done %s1050, 1024
        $region52: #{tpu_custom_call.1} parent=47 // pred_fallthru
          _
      $region48: #{tpu_custom_call.1} parent=5 // pred_fallthru
        _
    $region6: #{tpu_custom_call.1} parent=1 // loop_footer
      %s20 = sadd.s32 1, %s16
    $region7: #{tpu_custom_call.1} parent=1 // loop_footer_branch
      %15 = sbr.rel target = $region3
    $region8: #{tpu_custom_call.1} parent=1 // loop_exit
      _
    %1055 = vsyncpa [#allocation3], 1
    %s1056 = scalar_lea.sflag [#allocation3], 1
    %1057 = vsyncpa %s1056, 1
    %1058 = vsyncpa [#allocation4], 1
    %s1059 = scalar_lea.sflag [#allocation4], 1
    %1060 = vsyncpa %s1059, 1
    %1061 = vsyncpa [#allocation5], 1
    %s1062 = scalar_lea.sflag [#allocation5], 1
    %1063 = vsyncpa %s1062, 1

</llo_original>
